<compile_context>
chip_gen: v5e
topology: v5e:2x2
jax: 0.10.0
libtpu: 0.0.40
codegen_flags: <defaults>
</compile_context>

<pallas_src>
import functools

import jax
import jax.numpy as jnp
from jax import lax
from jax.experimental import pallas as pl
from jax.experimental.pallas import tpu as pltpu


# ------------------------------ helpers ------------------------------------ #
def _round_up(n, m):
    return ((n + m - 1) // m) * m


def _vmem_budget_bytes():
    """Scoped-VMEM budget: ~3/4 of physical capacity, with a safe fallback."""
    try:
        info = pltpu.get_tpu_info()
        cap = getattr(info, "vmem_capacity_bytes", None)
        if cap:
            return int(cap) * 3 // 4          # 96 MiB on v5e/v6e, 48 MiB on v7x
    except Exception:
        pass
    return 48 * 1024 * 1024                   # safe on every generation


# ----------------------------- Pallas kernel ------------------------------- #
def fused_rnn_kernel(x_ref, wih0_ref, b0_ref, whh0_ref, wcat_ref, br_ref,
                     wlin_ref, blin_ref, o_ref, h_ref, xp_ref,
                     *, t_total, tc, needs_mask, unroll):
    """Fused multi-layer tanh-RNN + linear head.

    Grid axis 0 = time chunks (sequential, 'arbitrary').

    x_ref   : (Tc*Bp, Dp)  bf16  time-major, batch-flattened input chunk
    wih0_ref: (Dp, Hp)     bf16  layer-0 W_ih^T
    b0_ref  : (1, Hp)      f32   layer-0 b_ih + b_hh
    whh0_ref: (Hp, Hp)     bf16  layer-0 W_hh^T
    wcat_ref: (max(L-1,1), 2*Hp, Hp) bf16  [W_ih^T ; W_hh^T] for layers 1..L-1
    br_ref  : (max(L-1,1), 1, Hp)    f32   b_ih + b_hh for layers 1..L-1
    wlin_ref: (Hp, Op)     bf16  head W^T
    blin_ref: (1, Op)      f32   head bias
    o_ref   : (Bp, Op)     f32   logits (written on the last chunk only)
    h_ref   : (L, Bp, Hp)  f32   scratch: per-layer hidden state (persists
                                 across chunks; in-register inside a chunk)
    xp_ref  : (Tc*Bp, Hp)  f32   scratch: hoisted layer-0 input projection
    """
    num_layers, b_pad, h_pad = h_ref.shape
    c = pl.program_id(0)

    @pl.when(c == 0)
    def _():
        h_ref[...] = jnp.zeros_like(h_ref)

    # Hoisted layer-0 input projection for the whole chunk: one big MXU matmul
    # over Tc*Bp rows instead of Tc tiny (Bp, Dp) matmuls on the serial path.
    xp_ref[...] = (
        jnp.dot(x_ref[...], wih0_ref[...], preferred_element_type=jnp.float32)
        + b0_ref[...]
    )

    # Hoist deep-layer bias broadcasts out of the timestep loop (JAX does not
    # CSE broadcast_in_dim; leaving them inside re-emits one per step).
    br_b = [jnp.broadcast_to(br_ref[l - 1], (b_pad, h_pad))
            for l in range(1, num_layers)]

    if needs_mask:
        valid = jnp.minimum(t_total - c * tc, tc)   # valid timesteps this chunk

    # Hidden state lives in registers for the whole chunk.
    hs0 = tuple(h_ref[l] for l in range(num_layers))

    def step(i, hs):
        row = pl.multiple_of(i * b_pad, b_pad)
        xp_t = xp_ref[pl.ds(row, b_pad), :]                       # (Bp, Hp) f32
        # Layer 0: recurrent matmul only (input projection hoisted above).
        h0 = jnp.tanh(
            xp_t + jnp.dot(hs[0].astype(jnp.bfloat16), whh0_ref[...],
                           preferred_element_type=jnp.float32))
        new_hs = [h0]
        prev = h0
        # Layers 1..L-1: single fused K = 2*Hp matmul per layer per step.
        for l in range(1, num_layers):
            lhs = jnp.concatenate(
                [prev.astype(jnp.bfloat16), hs[l].astype(jnp.bfloat16)],
                axis=-1)                                          # (Bp, 2*Hp)
            hl = jnp.tanh(
                jnp.dot(lhs, wcat_ref[l - 1],
                        preferred_element_type=jnp.float32)
                + br_b[l - 1])
            new_hs.append(hl)
            prev = hl
        if needs_mask:
            keep = i < valid
            return tuple(jnp.where(keep, hn, ho)
                         for hn, ho in zip(new_hs, hs))
        return tuple(new_hs)

    hs = lax.fori_loop(0, tc, step, hs0, unroll=unroll)

    # Persist hidden state across chunks (one store per layer per chunk).
    for l in range(num_layers):
        h_ref[l] = hs[l]

    # Fused classifier head: only h_T of the last layer is ever consumed.
    @pl.when(c == pl.num_programs(0) - 1)
    def _():
        o_ref[...] = (
            jnp.dot(hs[num_layers - 1].astype(jnp.bfloat16), wlin_ref[...],
                    preferred_element_type=jnp.float32)
            + blin_ref[...]
        ).astype(o_ref.dtype)


# ------------------------------ Wrapper ------------------------------------- #
@functools.partial(jax.jit,
                   static_argnames=("output_size", "num_layers", "max_chunk"))
def rnn_classifier_forward(x, prep, *, output_size, num_layers, max_chunk=128):
    """x: (B, T, input_size) batch_first, like the PyTorch module."""
    B, T, D = x.shape
    L = num_layers
    Dp, Hp = prep["wih0_t"].shape
    Op = prep["wlin_t"].shape[1]
    Bp = _round_up(B, 16)            # 16: bf16 sublane packing

    # Cast -> pad -> time-major -> flatten rows.  XLA fuses this into a single
    # convert+pad+transpose at bf16 width (half the bytes of the old f32 prep).
    x_bf = x.astype(jnp.bfloat16)
    x_pad = jnp.pad(x_bf, ((0, Bp - B), (0, 0), (0, Dp - D)))     # (Bp, T, Dp)
    x_tm = jnp.transpose(x_pad, (1, 0, 2)).reshape(T * Bp, Dp)    # (T*Bp, Dp)

    # ---- time-chunk size from an explicit VMEM budget ---------------------- #
    budget = _vmem_budget_bytes()
    n_deep = max(L - 1, 1)
    fixed = (2 * 2 * (Dp * Hp + Hp * Hp + n_deep * 2 * Hp * Hp + Hp * Op)  # bf16 weights (dbl-buffered)
             + 2 * 4 * (Hp + n_deep * Hp + Op)                             # f32 biases (dbl-buffered)
             + L * Bp * Hp * 4                                             # h scratch
             + 2 * Bp * Op * 4                                             # output block
             + (2 << 20))                                                  # headroom
    per_t = Bp * (2 * 2 * Dp + 4 * Hp)   # dbl-buffered bf16 input + f32 xp rows
    Tc = int(max(1, min(T, max_chunk, (budget - fixed) // per_t)))
    n_chunks = -(-T // Tc)
    needs_mask = (T % Tc) != 0

    kernel = functools.partial(
        fused_rnn_kernel, t_total=T, tc=Tc, needs_mask=needs_mask,
        unroll=int(min(Tc, 8)))

    flops = (2 * T * Bp * Dp * Hp
             + 2 * T * Bp * Hp * Hp * (2 * L - 1)
             + 2 * Bp * Hp * Op)
    transcendentals = T * Bp * Hp * L
    bytes_accessed = (2 * (T * Bp * Dp + Dp * Hp + Hp * Hp
                           + n_deep * 2 * Hp * Hp + Hp * Op)
                      + 4 * (Hp + n_deep * Hp + Op + Bp * Op))

    out = pl.pallas_call(
        kernel,
        out_shape=jax.ShapeDtypeStruct((Bp, Op), jnp.float32),
        grid_spec=pltpu.PrefetchScalarGridSpec(
            num_scalar_prefetch=0,
            grid=(n_chunks,),
            in_specs=[
                pl.BlockSpec((Tc * Bp, Dp), lambda c: (c, 0)),      # x chunk
                pl.BlockSpec((Dp, Hp), lambda c: (0, 0)),           # W_ih0^T
                pl.BlockSpec((1, Hp), lambda c: (0, 0)),            # b0
                pl.BlockSpec((Hp, Hp), lambda c: (0, 0)),           # W_hh0^T
                pl.BlockSpec(prep["wcat_t"].shape, lambda c: (0, 0, 0)),
                pl.BlockSpec(prep["br"].shape, lambda c: (0, 0, 0)),
                pl.BlockSpec((Hp, Op), lambda c: (0, 0)),           # head W^T
                pl.BlockSpec((1, Op), lambda c: (0, 0)),            # head bias
            ],
            out_specs=pl.BlockSpec((Bp, Op), lambda c: (0, 0)),
            scratch_shapes=[
                pltpu.VMEM((L, Bp, Hp), jnp.float32),      # hidden states
                pltpu.VMEM((Tc * Bp, Hp), jnp.float32),    # hoisted projection
            ],
        ),
        compiler_params=pltpu.CompilerParams(
            dimension_semantics=("arbitrary",),
            vmem_limit_bytes=int(budget),
        ),
        cost_estimate=pl.CostEstimate(
            flops=flops, transcendentals=transcendentals,
            bytes_accessed=bytes_accessed),
    )(x_tm, prep["wih0_t"], prep["b0"], prep["whh0_t"], prep["wcat_t"],
      prep["br"], prep["wlin_t"], prep["blin"])

    return out[:B, :output_size]


# --------------------------- Parameter prep --------------------------------- #
def prepare_params(params, compute_dtype=jnp.bfloat16):
    """Pre-transpose / pre-fuse / pad / cast weights once (not per call)."""
    layers = params["rnn_layers"]
    L = len(layers)
    H, D = layers[0][0].shape          # w_ih0: (H, D)
    O = params["lin_w"].shape[0]
    Hp, Dp, Op = _round_up(H, 128), _round_up(D, 128), _round_up(O, 128)

    def pad2(a, r, c):
        a = jnp.asarray(a, jnp.float32)
        return jnp.pad(a, ((0, r - a.shape[0]), (0, c - a.shape[1])))

    def pad1(a, n):
        a = jnp.asarray(a, jnp.float32)
        return jnp.pad(a, (0, n - a.shape[0]))

    w_ih0, w_hh0, b_ih0, b_hh0 = layers[0]
    wih0_t = pad2(w_ih0.T, Dp, Hp).astype(compute_dtype)          # (Dp, Hp)
    whh0_t = pad2(w_hh0.T, Hp, Hp).astype(compute_dtype)          # (Hp, Hp)
    b0 = pad1(b_ih0 + b_hh0, Hp).reshape(1, Hp)                   # f32

    if L > 1:
        # Fused per-layer [W_ih^T ; W_hh^T]: one K = 2*Hp matmul per step.
        wcat_t = jnp.stack([
            jnp.concatenate([pad2(layers[l][0].T, Hp, Hp),
                             pad2(layers[l][1].T, Hp, Hp)], axis=0)
            for l in range(1, L)]).astype(compute_dtype)          # (L-1,2Hp,Hp)
        br = jnp.stack([pad1(layers[l][2] + layers[l][3], Hp).reshape(1, Hp)
                        for l in range(1, L)])                    # (L-1, 1, Hp)
    else:   # dummies (never read: in-kernel layer loop is static over L)
        wcat_t = jnp.zeros((1, 2 * Hp, Hp), compute_dtype)
        br = jnp.zeros((1, 1, Hp), jnp.float32)

    wlin_t = pad2(params["lin_w"].T, Hp, Op).astype(compute_dtype)  # (Hp, Op)
    blin = pad1(params["lin_b"], Op).reshape(1, Op)                 # f32

    return {"wih0_t": wih0_t, "b0": b0, "whh0_t": whh0_t, "wcat_t": wcat_t,
            "br": br, "wlin_t": wlin_t, "blin": blin}


# --------------------------- Parameter init --------------------------------- #
def init_params(key, input_size, hidden_size, output_size, num_layers):
    # Deterministic init mimicking PyTorch's U(-1/sqrt(H), 1/sqrt(H)).
    bound = 1.0 / jnp.sqrt(jnp.float32(hidden_size))
    layers = []
    for l in range(num_layers):
        d_in = input_size if l == 0 else hidden_size
        key, k1, k2, k3, k4 = jax.random.split(key, 5)
        layers.append((
            jax.random.uniform(k1, (hidden_size, d_in), jnp.float32, -bound, bound),
            jax.random.uniform(k2, (hidden_size, hidden_size), jnp.float32, -bound, bound),
            jax.random.uniform(k3, (hidden_size,), jnp.float32, -bound, bound),
            jax.random.uniform(k4, (hidden_size,), jnp.float32, -bound, bound),
        ))
    key, k5, k6 = jax.random.split(key, 3)
    lin_w = jax.random.uniform(k5, (output_size, hidden_size), jnp.float32, -bound, bound)
    lin_b = jax.random.uniform(k6, (output_size,), jnp.float32, -bound, bound)
    return {"rnn_layers": layers, "lin_w": lin_w, "lin_b": lin_b}


# --------------------------- Pure-JAX references ---------------------------- #
def reference_forward(x, params):
    """Exact f32 reference (the PyTorch module's forward)."""
    seq = jnp.transpose(x, (1, 0, 2)).astype(jnp.float32)
    for (w_ih, w_hh, b_ih, b_hh) in params["rnn_layers"]:
        T, B, _ = seq.shape
        H = w_hh.shape[0]
        h = jnp.zeros((B, H), jnp.float32)
        outs = []
        for t in range(T):
            h = jnp.tanh(
                jnp.dot(seq[t], w_ih.T, precision=lax.Precision.HIGHEST) + b_ih
                + jnp.dot(h, w_hh.T, precision=lax.Precision.HIGHEST) + b_hh)
            outs.append(h)
        seq = jnp.stack(outs, axis=0)
    return (jnp.dot(seq[-1], params["lin_w"].T, precision=lax.Precision.HIGHEST)
            + params["lin_b"])


def reference_forward_bf16(x, params):
    """Reference with the kernel's numerics (bf16 matmul operands, f32 accum)."""
    bf = jnp.bfloat16
    seq = jnp.transpose(x, (1, 0, 2)).astype(jnp.float32)
    for (w_ih, w_hh, b_ih, b_hh) in params["rnn_layers"]:
        T, B, _ = seq.shape
        H = w_hh.shape[0]
        h = jnp.zeros((B, H), jnp.float32)
        outs = []
        for t in range(T):
            pre = (jnp.dot(seq[t].astype(bf), w_ih.T.astype(bf),
                           preferred_element_type=jnp.float32)
                   + jnp.dot(h.astype(bf), w_hh.T.astype(bf),
                             preferred_element_type=jnp.float32)
                   + b_ih + b_hh)
            h = jnp.tanh(pre)
            outs.append(h)
        seq = jnp.stack(outs, axis=0)
    return (jnp.dot(seq[-1].astype(bf), params["lin_w"].T.astype(bf),
                    preferred_element_type=jnp.float32) + params["lin_b"])


# --------------------------------- Test ------------------------------------- #
def _run_case(key, batch, seq_len, input_size, hidden_size, output_size,
              num_layers, max_chunk):
    kx, kp = jax.random.split(key)
    x = jax.random.normal(kx, (batch, seq_len, input_size), jnp.float32)
    params = init_params(kp, input_size, hidden_size, output_size, num_layers)
    prep = prepare_params(params)

    y = rnn_classifier_forward(x, prep, output_size=output_size,
                               num_layers=num_layers, max_chunk=max_chunk)
    y = jax.block_until_ready(y)
    assert y.shape == (batch, output_size)

    # Strict structural check vs a reference with identical (bf16) numerics.
    y_bf = reference_forward_bf16(x, params)
    assert jnp.allclose(y, y_bf, atol=2e-3, rtol=2e-3), "mismatch vs bf16 ref"
    # Loose semantic check vs the exact f32 reference (expected bf16 rounding).
    y_32 = reference_forward(x, params)
    assert jnp.allclose(y, y_32, atol=1e-1, rtol=1e-1), "mismatch vs f32 ref"


if __name__ == "__main__":
    key = jax.random.PRNGKey(0)
    k1, k2 = jax.random.split(key)
    # Spec-sized case: batch=2, seq=8, input=16, hidden=32, output=4, layers=2.
    _run_case(k1, batch=2, seq_len=8, input_size=16, hidden_size=32,
              output_size=4, num_layers=2, max_chunk=128)
    # Robustness case: multi-chunk grid with a masked tail (T % Tc != 0),
    # 3 layers, non-aligned sizes -> exercises h carry across chunks + masking.
    _run_case(k2, batch=3, seq_len=11, input_size=24, hidden_size=48,
              output_size=5, num_layers=3, max_chunk=4)
    print("KERNEL_OK")
</pallas_src>

<mosaic_0001>
module attributes {stable_mosaic.version = 11 : i64} {
  func.func @fused_rnn_kernel(%arg0: i32, %arg1: memref<128x128xbf16, #tpu.memory_space<vmem>>, %arg2: memref<128x128xbf16, #tpu.memory_space<vmem>>, %arg3: memref<1x128xf32, #tpu.memory_space<vmem>>, %arg4: memref<128x128xbf16, #tpu.memory_space<vmem>>, %arg5: memref<1x256x128xbf16, #tpu.memory_space<vmem>>, %arg6: memref<1x1x128xf32, #tpu.memory_space<vmem>>, %arg7: memref<128x128xbf16, #tpu.memory_space<vmem>>, %arg8: memref<1x128xf32, #tpu.memory_space<vmem>>, %arg9: memref<16x128xf32, #tpu.memory_space<vmem>>, %arg10: memref<2x16x128xf32, #tpu.memory_space<vmem>>, %arg11: memref<128x128xf32, #tpu.memory_space<vmem>>) attributes {dimension_semantics = [#tpu.dimension_semantics<arbitrary>], iteration_bounds = array<i64: 1>, scalar_prefetch = 0 : i64, scratch_operands = 2 : i64, tpu.core_type = #tpu.core_type<tc>, window_params = [{transform_indices = @transform_0, window_bounds = array<i64: 128, 128>}, {pipeline_mode = #tpu.pipeline_mode<synchronous>, transform_indices = @transform_1, window_bounds = array<i64: 128, 128>}, {pipeline_mode = #tpu.pipeline_mode<synchronous>, transform_indices = @transform_2, window_bounds = array<i64: 1, 128>}, {pipeline_mode = #tpu.pipeline_mode<synchronous>, transform_indices = @transform_3, window_bounds = array<i64: 128, 128>}, {pipeline_mode = #tpu.pipeline_mode<synchronous>, transform_indices = @transform_4, window_bounds = array<i64: 1, 256, 128>}, {pipeline_mode = #tpu.pipeline_mode<synchronous>, transform_indices = @transform_5, window_bounds = array<i64: 1, 1, 128>}, {pipeline_mode = #tpu.pipeline_mode<synchronous>, transform_indices = @transform_6, window_bounds = array<i64: 128, 128>}, {pipeline_mode = #tpu.pipeline_mode<synchronous>, transform_indices = @transform_7, window_bounds = array<i64: 1, 128>}, {pipeline_mode = #tpu.pipeline_mode<synchronous>, transform_indices = @transform_8, window_bounds = array<i64: 16, 128>}]} {
    %c0_i32 = arith.constant 0 : i32
    %0 = arith.cmpi eq, %arg0, %c0_i32 : i32
    %1 = arith.extui %0 : i1 to i32
    %c0_i32_0 = arith.constant 0 : i32
    %2 = arith.cmpi ne, %1, %c0_i32_0 : i32
    scf.if %2 {
      %cst_96 = arith.constant 0.000000e+00 : f32
      %163 = vector.broadcast %cst_96 : f32 to vector<2x16x128xf32>
      %c0_97 = arith.constant 0 : index
      %c0_98 = arith.constant 0 : index
      %c0_99 = arith.constant 0 : index
      %164 = vector.load %arg10[%c0_97, %c0_98, %c0_99] : memref<2x16x128xf32, #tpu.memory_space<vmem>>, vector<2x16x128xf32>
      tpu.vector_store %arg10[%c0_97, %c0_98, %c0_99], %163 {strides = array<i32>} : memref<2x16x128xf32, #tpu.memory_space<vmem>>, vector<2x16x128xf32>,
    } else {
    }
    %c0 = arith.constant 0 : index
    %c0_1 = arith.constant 0 : index
    %3 = vector.load %arg1[%c0, %c0_1] : memref<128x128xbf16, #tpu.memory_space<vmem>>, vector<128x128xbf16>
    %c0_2 = arith.constant 0 : index
    %c0_3 = arith.constant 0 : index
    %4 = vector.load %arg2[%c0_2, %c0_3] : memref<128x128xbf16, #tpu.memory_space<vmem>>, vector<128x128xbf16>
    %cst = arith.constant dense<0.000000e+00> : vector<128x128xf32>
    %5 = tpu.matmul %3, %4, %cst {dimension_numbers = #tpu.dot_dimension_numbers<[1], [0], [0], [1], [0, 0, 1, 1], [], []>} : vector<128x128xbf16>, vector<128x128xbf16>, vector<128x128xf32> -> vector<128x128xf32>
    %c0_4 = arith.constant 0 : index
    %c0_5 = arith.constant 0 : index
    %6 = vector.load %arg3[%c0_4, %c0_5] : memref<1x128xf32, #tpu.memory_space<vmem>>, vector<1x128xf32>
    %7 = vector.broadcast %6 : vector<1x128xf32> to vector<128x128xf32>
    %8 = arith.addf %5, %7 : vector<128x128xf32>
    %c0_6 = arith.constant 0 : index
    %c0_7 = arith.constant 0 : index
    %9 = vector.load %arg11[%c0_6, %c0_7] : memref<128x128xf32, #tpu.memory_space<vmem>>, vector<128x128xf32>
    tpu.vector_store %arg11[%c0_6, %c0_7], %8 {strides = array<i32>} : memref<128x128xf32, #tpu.memory_space<vmem>>, vector<128x128xf32>,
    %c0_8 = arith.constant 0 : index
    %c0_9 = arith.constant 0 : index
    %c0_10 = arith.constant 0 : index
    %10 = vector.load %arg6[%c0_8, %c0_9, %c0_10] : memref<1x1x128xf32, #tpu.memory_space<vmem>>, vector<1x1x128xf32>
    %11 = vector.shape_cast %10 : vector<1x1x128xf32> to vector<1x128xf32>
    %12 = vector.shape_cast %11 : vector<1x128xf32> to vector<1x128xf32>
    %13 = vector.broadcast %12 : vector<1x128xf32> to vector<16x128xf32>
    %c0_11 = arith.constant 0 : index
    %c0_12 = arith.constant 0 : index
    %c0_13 = arith.constant 0 : index
    %14 = vector.load %arg10[%c0_11, %c0_12, %c0_13] : memref<2x16x128xf32, #tpu.memory_space<vmem>>, vector<1x16x128xf32>
    %15 = vector.shape_cast %14 : vector<1x16x128xf32> to vector<16x128xf32>
    %c1 = arith.constant 1 : index
    %c0_14 = arith.constant 0 : index
    %c0_15 = arith.constant 0 : index
    %16 = vector.load %arg10[%c1, %c0_14, %c0_15] : memref<2x16x128xf32, #tpu.memory_space<vmem>>, vector<1x16x128xf32>
    %17 = vector.shape_cast %16 : vector<1x16x128xf32> to vector<16x128xf32>
    %c0_i32_16 = arith.constant 0 : i32
    %c16_i32 = arith.constant 16 : i32
    %18 = arith.muli %c0_i32_16, %c16_i32 : i32
    %19 = tpu.assume_multiple %18, 16 : i32
    %20 = arith.index_cast %19 : i32 to index
    %c0_17 = arith.constant 0 : index
    %21 = vector.load %arg11[%20, %c0_17] : memref<128x128xf32, #tpu.memory_space<vmem>>, vector<16x128xf32>
    %22 = arith.truncf %15 : vector<16x128xf32> to vector<16x128xbf16>
    %c0_18 = arith.constant 0 : index
    %c0_19 = arith.constant 0 : index
    %23 = vector.load %arg4[%c0_18, %c0_19] : memref<128x128xbf16, #tpu.memory_space<vmem>>, vector<128x128xbf16>
    %cst_20 = arith.constant dense<0.000000e+00> : vector<16x128xf32>
    %24 = tpu.matmul %22, %23, %cst_20 {dimension_numbers = #tpu.dot_dimension_numbers<[1], [0], [0], [1], [0, 0, 1, 1], [], []>} : vector<16x128xbf16>, vector<128x128xbf16>, vector<16x128xf32> -> vector<16x128xf32>
    %25 = arith.addf %21, %24 : vector<16x128xf32>
    %26 = math.tanh %25 : vector<16x128xf32>
    %27 = arith.truncf %26 : vector<16x128xf32> to vector<16x128xbf16>
    %28 = arith.truncf %17 : vector<16x128xf32> to vector<16x128xbf16>
    %29 = tpu.concatenate %27, %28 in 1 : vector<16x128xbf16>, vector<16x128xbf16> -> vector<16x256xbf16>
    %c0_21 = arith.constant 0 : index
    %c0_22 = arith.constant 0 : index
    %c0_23 = arith.constant 0 : index
    %30 = vector.load %arg5[%c0_21, %c0_22, %c0_23] : memref<1x256x128xbf16, #tpu.memory_space<vmem>>, vector<1x256x128xbf16>
    %31 = vector.shape_cast %30 : vector<1x256x128xbf16> to vector<256x128xbf16>
    %cst_24 = arith.constant dense<0.000000e+00> : vector<16x128xf32>
    %32 = tpu.matmul %29, %31, %cst_24 {dimension_numbers = #tpu.dot_dimension_numbers<[1], [0], [0], [1], [0, 0, 1, 1], [], []>} : vector<16x256xbf16>, vector<256x128xbf16>, vector<16x128xf32> -> vector<16x128xf32>
    %33 = arith.addf %32, %13 : vector<16x128xf32>
    %34 = math.tanh %33 : vector<16x128xf32>
    %c1_i32 = arith.constant 1 : i32
    %c16_i32_25 = arith.constant 16 : i32
    %35 = arith.muli %c1_i32, %c16_i32_25 : i32
    %36 = tpu.assume_multiple %35, 16 : i32
    %37 = arith.index_cast %36 : i32 to index
    %c0_26 = arith.constant 0 : index
    %38 = vector.load %arg11[%37, %c0_26] : memref<128x128xf32, #tpu.memory_space<vmem>>, vector<16x128xf32>
    %39 = arith.truncf %26 : vector<16x128xf32> to vector<16x128xbf16>
    %c0_27 = arith.constant 0 : index
    %c0_28 = arith.constant 0 : index
    %40 = vector.load %arg4[%c0_27, %c0_28] : memref<128x128xbf16, #tpu.memory_space<vmem>>, vector<128x128xbf16>
    %cst_29 = arith.constant dense<0.000000e+00> : vector<16x128xf32>
    %41 = tpu.matmul %39, %40, %cst_29 {dimension_numbers = #tpu.dot_dimension_numbers<[1], [0], [0], [1], [0, 0, 1, 1], [], []>} : vector<16x128xbf16>, vector<128x128xbf16>, vector<16x128xf32> -> vector<16x128xf32>
    %42 = arith.addf %38, %41 : vector<16x128xf32>
    %43 = math.tanh %42 : vector<16x128xf32>
    %44 = arith.truncf %43 : vector<16x128xf32> to vector<16x128xbf16>
    %45 = arith.truncf %34 : vector<16x128xf32> to vector<16x128xbf16>
    %46 = tpu.concatenate %44, %45 in 1 : vector<16x128xbf16>, vector<16x128xbf16> -> vector<16x256xbf16>
    %c0_30 = arith.constant 0 : index
    %c0_31 = arith.constant 0 : index
    %c0_32 = arith.constant 0 : index
    %47 = vector.load %arg5[%c0_30, %c0_31, %c0_32] : memref<1x256x128xbf16, #tpu.memory_space<vmem>>, vector<1x256x128xbf16>
    %48 = vector.shape_cast %47 : vector<1x256x128xbf16> to vector<256x128xbf16>
    %cst_33 = arith.constant dense<0.000000e+00> : vector<16x128xf32>
    %49 = tpu.matmul %46, %48, %cst_33 {dimension_numbers = #tpu.dot_dimension_numbers<[1], [0], [0], [1], [0, 0, 1, 1], [], []>} : vector<16x256xbf16>, vector<256x128xbf16>, vector<16x128xf32> -> vector<16x128xf32>
    %50 = arith.addf %49, %13 : vector<16x128xf32>
    %51 = math.tanh %50 : vector<16x128xf32>
    %c2_i32 = arith.constant 2 : i32
    %c16_i32_34 = arith.constant 16 : i32
    %52 = arith.muli %c2_i32, %c16_i32_34 : i32
    %53 = tpu.assume_multiple %52, 16 : i32
    %54 = arith.index_cast %53 : i32 to index
    %c0_35 = arith.constant 0 : index
    %55 = vector.load %arg11[%54, %c0_35] : memref<128x128xf32, #tpu.memory_space<vmem>>, vector<16x128xf32>
    %56 = arith.truncf %43 : vector<16x128xf32> to vector<16x128xbf16>
    %c0_36 = arith.constant 0 : index
    %c0_37 = arith.constant 0 : index
    %57 = vector.load %arg4[%c0_36, %c0_37] : memref<128x128xbf16, #tpu.memory_space<vmem>>, vector<128x128xbf16>
    %cst_38 = arith.constant dense<0.000000e+00> : vector<16x128xf32>
    %58 = tpu.matmul %56, %57, %cst_38 {dimension_numbers = #tpu.dot_dimension_numbers<[1], [0], [0], [1], [0, 0, 1, 1], [], []>} : vector<16x128xbf16>, vector<128x128xbf16>, vector<16x128xf32> -> vector<16x128xf32>
    %59 = arith.addf %55, %58 : vector<16x128xf32>
    %60 = math.tanh %59 : vector<16x128xf32>
    %61 = arith.truncf %60 : vector<16x128xf32> to vector<16x128xbf16>
    %62 = arith.truncf %51 : vector<16x128xf32> to vector<16x128xbf16>
    %63 = tpu.concatenate %61, %62 in 1 : vector<16x128xbf16>, vector<16x128xbf16> -> vector<16x256xbf16>
    %c0_39 = arith.constant 0 : index
    %c0_40 = arith.constant 0 : index
    %c0_41 = arith.constant 0 : index
    %64 = vector.load %arg5[%c0_39, %c0_40, %c0_41] : memref<1x256x128xbf16, #tpu.memory_space<vmem>>, vector<1x256x128xbf16>
    %65 = vector.shape_cast %64 : vector<1x256x128xbf16> to vector<256x128xbf16>
    %cst_42 = arith.constant dense<0.000000e+00> : vector<16x128xf32>
    %66 = tpu.matmul %63, %65, %cst_42 {dimension_numbers = #tpu.dot_dimension_numbers<[1], [0], [0], [1], [0, 0, 1, 1], [], []>} : vector<16x256xbf16>, vector<256x128xbf16>, vector<16x128xf32> -> vector<16x128xf32>
    %67 = arith.addf %66, %13 : vector<16x128xf32>
    %68 = math.tanh %67 : vector<16x128xf32>
    %c3_i32 = arith.constant 3 : i32
    %c16_i32_43 = arith.constant 16 : i32
    %69 = arith.muli %c3_i32, %c16_i32_43 : i32
    %70 = tpu.assume_multiple %69, 16 : i32
    %71 = arith.index_cast %70 : i32 to index
    %c0_44 = arith.constant 0 : index
    %72 = vector.load %arg11[%71, %c0_44] : memref<128x128xf32, #tpu.memory_space<vmem>>, vector<16x128xf32>
    %73 = arith.truncf %60 : vector<16x128xf32> to vector<16x128xbf16>
    %c0_45 = arith.constant 0 : index
    %c0_46 = arith.constant 0 : index
    %74 = vector.load %arg4[%c0_45, %c0_46] : memref<128x128xbf16, #tpu.memory_space<vmem>>, vector<128x128xbf16>
    %cst_47 = arith.constant dense<0.000000e+00> : vector<16x128xf32>
    %75 = tpu.matmul %73, %74, %cst_47 {dimension_numbers = #tpu.dot_dimension_numbers<[1], [0], [0], [1], [0, 0, 1, 1], [], []>} : vector<16x128xbf16>, vector<128x128xbf16>, vector<16x128xf32> -> vector<16x128xf32>
    %76 = arith.addf %72, %75 : vector<16x128xf32>
    %77 = math.tanh %76 : vector<16x128xf32>
    %78 = arith.truncf %77 : vector<16x128xf32> to vector<16x128xbf16>
    %79 = arith.truncf %68 : vector<16x128xf32> to vector<16x128xbf16>
    %80 = tpu.concatenate %78, %79 in 1 : vector<16x128xbf16>, vector<16x128xbf16> -> vector<16x256xbf16>
    %c0_48 = arith.constant 0 : index
    %c0_49 = arith.constant 0 : index
    %c0_50 = arith.constant 0 : index
    %81 = vector.load %arg5[%c0_48, %c0_49, %c0_50] : memref<1x256x128xbf16, #tpu.memory_space<vmem>>, vector<1x256x128xbf16>
    %82 = vector.shape_cast %81 : vector<1x256x128xbf16> to vector<256x128xbf16>
    %cst_51 = arith.constant dense<0.000000e+00> : vector<16x128xf32>
    %83 = tpu.matmul %80, %82, %cst_51 {dimension_numbers = #tpu.dot_dimension_numbers<[1], [0], [0], [1], [0, 0, 1, 1], [], []>} : vector<16x256xbf16>, vector<256x128xbf16>, vector<16x128xf32> -> vector<16x128xf32>
    %84 = arith.addf %83, %13 : vector<16x128xf32>
    %85 = math.tanh %84 : vector<16x128xf32>
    %c4_i32 = arith.constant 4 : i32
    %c16_i32_52 = arith.constant 16 : i32
    %86 = arith.muli %c4_i32, %c16_i32_52 : i32
    %87 = tpu.assume_multiple %86, 16 : i32
    %88 = arith.index_cast %87 : i32 to index
    %c0_53 = arith.constant 0 : index
    %89 = vector.load %arg11[%88, %c0_53] : memref<128x128xf32, #tpu.memory_space<vmem>>, vector<16x128xf32>
    %90 = arith.truncf %77 : vector<16x128xf32> to vector<16x128xbf16>
    %c0_54 = arith.constant 0 : index
    %c0_55 = arith.constant 0 : index
    %91 = vector.load %arg4[%c0_54, %c0_55] : memref<128x128xbf16, #tpu.memory_space<vmem>>, vector<128x128xbf16>
    %cst_56 = arith.constant dense<0.000000e+00> : vector<16x128xf32>
    %92 = tpu.matmul %90, %91, %cst_56 {dimension_numbers = #tpu.dot_dimension_numbers<[1], [0], [0], [1], [0, 0, 1, 1], [], []>} : vector<16x128xbf16>, vector<128x128xbf16>, vector<16x128xf32> -> vector<16x128xf32>
    %93 = arith.addf %89, %92 : vector<16x128xf32>
    %94 = math.tanh %93 : vector<16x128xf32>
    %95 = arith.truncf %94 : vector<16x128xf32> to vector<16x128xbf16>
    %96 = arith.truncf %85 : vector<16x128xf32> to vector<16x128xbf16>
    %97 = tpu.concatenate %95, %96 in 1 : vector<16x128xbf16>, vector<16x128xbf16> -> vector<16x256xbf16>
    %c0_57 = arith.constant 0 : index
    %c0_58 = arith.constant 0 : index
    %c0_59 = arith.constant 0 : index
    %98 = vector.load %arg5[%c0_57, %c0_58, %c0_59] : memref<1x256x128xbf16, #tpu.memory_space<vmem>>, vector<1x256x128xbf16>
    %99 = vector.shape_cast %98 : vector<1x256x128xbf16> to vector<256x128xbf16>
    %cst_60 = arith.constant dense<0.000000e+00> : vector<16x128xf32>
    %100 = tpu.matmul %97, %99, %cst_60 {dimension_numbers = #tpu.dot_dimension_numbers<[1], [0], [0], [1], [0, 0, 1, 1], [], []>} : vector<16x256xbf16>, vector<256x128xbf16>, vector<16x128xf32> -> vector<16x128xf32>
    %101 = arith.addf %100, %13 : vector<16x128xf32>
    %102 = math.tanh %101 : vector<16x128xf32>
    %c5_i32 = arith.constant 5 : i32
    %c16_i32_61 = arith.constant 16 : i32
    %103 = arith.muli %c5_i32, %c16_i32_61 : i32
    %104 = tpu.assume_multiple %103, 16 : i32
    %105 = arith.index_cast %104 : i32 to index
    %c0_62 = arith.constant 0 : index
    %106 = vector.load %arg11[%105, %c0_62] : memref<128x128xf32, #tpu.memory_space<vmem>>, vector<16x128xf32>
    %107 = arith.truncf %94 : vector<16x128xf32> to vector<16x128xbf16>
    %c0_63 = arith.constant 0 : index
    %c0_64 = arith.constant 0 : index
    %108 = vector.load %arg4[%c0_63, %c0_64] : memref<128x128xbf16, #tpu.memory_space<vmem>>, vector<128x128xbf16>
    %cst_65 = arith.constant dense<0.000000e+00> : vector<16x128xf32>
    %109 = tpu.matmul %107, %108, %cst_65 {dimension_numbers = #tpu.dot_dimension_numbers<[1], [0], [0], [1], [0, 0, 1, 1], [], []>} : vector<16x128xbf16>, vector<128x128xbf16>, vector<16x128xf32> -> vector<16x128xf32>
    %110 = arith.addf %106, %109 : vector<16x128xf32>
    %111 = math.tanh %110 : vector<16x128xf32>
    %112 = arith.truncf %111 : vector<16x128xf32> to vector<16x128xbf16>
    %113 = arith.truncf %102 : vector<16x128xf32> to vector<16x128xbf16>
    %114 = tpu.concatenate %112, %113 in 1 : vector<16x128xbf16>, vector<16x128xbf16> -> vector<16x256xbf16>
    %c0_66 = arith.constant 0 : index
    %c0_67 = arith.constant 0 : index
    %c0_68 = arith.constant 0 : index
    %115 = vector.load %arg5[%c0_66, %c0_67, %c0_68] : memref<1x256x128xbf16, #tpu.memory_space<vmem>>, vector<1x256x128xbf16>
    %116 = vector.shape_cast %115 : vector<1x256x128xbf16> to vector<256x128xbf16>
    %cst_69 = arith.constant dense<0.000000e+00> : vector<16x128xf32>
    %117 = tpu.matmul %114, %116, %cst_69 {dimension_numbers = #tpu.dot_dimension_numbers<[1], [0], [0], [1], [0, 0, 1, 1], [], []>} : vector<16x256xbf16>, vector<256x128xbf16>, vector<16x128xf32> -> vector<16x128xf32>
    %118 = arith.addf %117, %13 : vector<16x128xf32>
    %119 = math.tanh %118 : vector<16x128xf32>
    %c6_i32 = arith.constant 6 : i32
    %c16_i32_70 = arith.constant 16 : i32
    %120 = arith.muli %c6_i32, %c16_i32_70 : i32
    %121 = tpu.assume_multiple %120, 16 : i32
    %122 = arith.index_cast %121 : i32 to index
    %c0_71 = arith.constant 0 : index
    %123 = vector.load %arg11[%122, %c0_71] : memref<128x128xf32, #tpu.memory_space<vmem>>, vector<16x128xf32>
    %124 = arith.truncf %111 : vector<16x128xf32> to vector<16x128xbf16>
    %c0_72 = arith.constant 0 : index
    %c0_73 = arith.constant 0 : index
    %125 = vector.load %arg4[%c0_72, %c0_73] : memref<128x128xbf16, #tpu.memory_space<vmem>>, vector<128x128xbf16>
    %cst_74 = arith.constant dense<0.000000e+00> : vector<16x128xf32>
    %126 = tpu.matmul %124, %125, %cst_74 {dimension_numbers = #tpu.dot_dimension_numbers<[1], [0], [0], [1], [0, 0, 1, 1], [], []>} : vector<16x128xbf16>, vector<128x128xbf16>, vector<16x128xf32> -> vector<16x128xf32>
    %127 = arith.addf %123, %126 : vector<16x128xf32>
    %128 = math.tanh %127 : vector<16x128xf32>
    %129 = arith.truncf %128 : vector<16x128xf32> to vector<16x128xbf16>
    %130 = arith.truncf %119 : vector<16x128xf32> to vector<16x128xbf16>
    %131 = tpu.concatenate %129, %130 in 1 : vector<16x128xbf16>, vector<16x128xbf16> -> vector<16x256xbf16>
    %c0_75 = arith.constant 0 : index
    %c0_76 = arith.constant 0 : index
    %c0_77 = arith.constant 0 : index
    %132 = vector.load %arg5[%c0_75, %c0_76, %c0_77] : memref<1x256x128xbf16, #tpu.memory_space<vmem>>, vector<1x256x128xbf16>
    %133 = vector.shape_cast %132 : vector<1x256x128xbf16> to vector<256x128xbf16>
    %cst_78 = arith.constant dense<0.000000e+00> : vector<16x128xf32>
    %134 = tpu.matmul %131, %133, %cst_78 {dimension_numbers = #tpu.dot_dimension_numbers<[1], [0], [0], [1], [0, 0, 1, 1], [], []>} : vector<16x256xbf16>, vector<256x128xbf16>, vector<16x128xf32> -> vector<16x128xf32>
    %135 = arith.addf %134, %13 : vector<16x128xf32>
    %136 = math.tanh %135 : vector<16x128xf32>
    %c7_i32 = arith.constant 7 : i32
    %c16_i32_79 = arith.constant 16 : i32
    %137 = arith.muli %c7_i32, %c16_i32_79 : i32
    %138 = tpu.assume_multiple %137, 16 : i32
    %139 = arith.index_cast %138 : i32 to index
    %c0_80 = arith.constant 0 : index
    %140 = vector.load %arg11[%139, %c0_80] : memref<128x128xf32, #tpu.memory_space<vmem>>, vector<16x128xf32>
    %141 = arith.truncf %128 : vector<16x128xf32> to vector<16x128xbf16>
    %c0_81 = arith.constant 0 : index
    %c0_82 = arith.constant 0 : index
    %142 = vector.load %arg4[%c0_81, %c0_82] : memref<128x128xbf16, #tpu.memory_space<vmem>>, vector<128x128xbf16>
    %cst_83 = arith.constant dense<0.000000e+00> : vector<16x128xf32>
    %143 = tpu.matmul %141, %142, %cst_83 {dimension_numbers = #tpu.dot_dimension_numbers<[1], [0], [0], [1], [0, 0, 1, 1], [], []>} : vector<16x128xbf16>, vector<128x128xbf16>, vector<16x128xf32> -> vector<16x128xf32>
    %144 = arith.addf %140, %143 : vector<16x128xf32>
    %145 = math.tanh %144 : vector<16x128xf32>
    %146 = arith.truncf %145 : vector<16x128xf32> to vector<16x128xbf16>
    %147 = arith.truncf %136 : vector<16x128xf32> to vector<16x128xbf16>
    %148 = tpu.concatenate %146, %147 in 1 : vector<16x128xbf16>, vector<16x128xbf16> -> vector<16x256xbf16>
    %c0_84 = arith.constant 0 : index
    %c0_85 = arith.constant 0 : index
    %c0_86 = arith.constant 0 : index
    %149 = vector.load %arg5[%c0_84, %c0_85, %c0_86] : memref<1x256x128xbf16, #tpu.memory_space<vmem>>, vector<1x256x128xbf16>
    %150 = vector.shape_cast %149 : vector<1x256x128xbf16> to vector<256x128xbf16>
    %cst_87 = arith.constant dense<0.000000e+00> : vector<16x128xf32>
    %151 = tpu.matmul %148, %150, %cst_87 {dimension_numbers = #tpu.dot_dimension_numbers<[1], [0], [0], [1], [0, 0, 1, 1], [], []>} : vector<16x256xbf16>, vector<256x128xbf16>, vector<16x128xf32> -> vector<16x128xf32>
    %152 = arith.addf %151, %13 : vector<16x128xf32>
    %153 = math.tanh %152 : vector<16x128xf32>
    %c8_i32 = arith.constant 8 : i32
    %c0_88 = arith.constant 0 : index
    %c0_89 = arith.constant 0 : index
    %c0_90 = arith.constant 0 : index
    %154 = vector.load %arg10[%c0_88, %c0_89, %c0_90] : memref<2x16x128xf32, #tpu.memory_space<vmem>>, vector<1x16x128xf32>
    %155 = vector.shape_cast %154 : vector<1x16x128xf32> to vector<16x128xf32>
    %156 = vector.shape_cast %145 : vector<16x128xf32> to vector<1x16x128xf32>
    tpu.vector_store %arg10[%c0_88, %c0_89, %c0_90], %156 {strides = array<i32>} : memref<2x16x128xf32, #tpu.memory_space<vmem>>, vector<1x16x128xf32>,
    %c1_91 = arith.constant 1 : index
    %c0_92 = arith.constant 0 : index
    %c0_93 = arith.constant 0 : index
    %157 = vector.load %arg10[%c1_91, %c0_92, %c0_93] : memref<2x16x128xf32, #tpu.memory_space<vmem>>, vector<1x16x128xf32>
    %158 = vector.shape_cast %157 : vector<1x16x128xf32> to vector<16x128xf32>
    %159 = vector.shape_cast %153 : vector<16x128xf32> to vector<1x16x128xf32>
    tpu.vector_store %arg10[%c1_91, %c0_92, %c0_93], %159 {strides = array<i32>} : memref<2x16x128xf32, #tpu.memory_space<vmem>>, vector<1x16x128xf32>,
    %c0_i32_94 = arith.constant 0 : i32
    %160 = arith.cmpi eq, %arg0, %c0_i32_94 : i32
    %161 = arith.extui %160 : i1 to i32
    %c0_i32_95 = arith.constant 0 : i32
    %162 = arith.cmpi ne, %161, %c0_i32_95 : i32
    scf.if %162 {
      %163 = arith.truncf %153 : vector<16x128xf32> to vector<16x128xbf16>
      %c0_96 = arith.constant 0 : index
      %c0_97 = arith.constant 0 : index
      %164 = vector.load %arg7[%c0_96, %c0_97] : memref<128x128xbf16, #tpu.memory_space<vmem>>, vector<128x128xbf16>
      %cst_98 = arith.constant dense<0.000000e+00> : vector<16x128xf32>
      %165 = tpu.matmul %163, %164, %cst_98 {dimension_numbers = #tpu.dot_dimension_numbers<[1], [0], [0], [1], [0, 0, 1, 1], [], []>} : vector<16x128xbf16>, vector<128x128xbf16>, vector<16x128xf32> -> vector<16x128xf32>
      %c0_99 = arith.constant 0 : index
      %c0_100 = arith.constant 0 : index
      %166 = vector.load %arg8[%c0_99, %c0_100] : memref<1x128xf32, #tpu.memory_space<vmem>>, vector<1x128xf32>
      %167 = vector.broadcast %166 : vector<1x128xf32> to vector<16x128xf32>
      %168 = arith.addf %165, %167 : vector<16x128xf32>
      %c0_101 = arith.constant 0 : index
      %c0_102 = arith.constant 0 : index
      %169 = vector.load %arg9[%c0_101, %c0_102] : memref<16x128xf32, #tpu.memory_space<vmem>>, vector<16x128xf32>
      tpu.vector_store %arg9[%c0_101, %c0_102], %168 {strides = array<i32>} : memref<16x128xf32, #tpu.memory_space<vmem>>, vector<16x128xf32>,
    } else {
    }
    return
  }
  func.func @transform_0(%arg0: i32) -> (i32, i32) {
    %c0_i32 = arith.constant 0 : i32
    %c0_i32_0 = arith.constant 0 : i32
    return %arg0, %c0_i32 : i32, i32
  }
  func.func @transform_1(%arg0: i32) -> (i32, i32) {
    %c0_i32 = arith.constant 0 : i32
    %c0_i32_0 = arith.constant 0 : i32
    %c0_i32_1 = arith.constant 0 : i32
    return %c0_i32, %c0_i32_0 : i32, i32
  }
  func.func @transform_2(%arg0: i32) -> (i32, i32) {
    %c0_i32 = arith.constant 0 : i32
    %c0_i32_0 = arith.constant 0 : i32
    %c0_i32_1 = arith.constant 0 : i32
    return %c0_i32, %c0_i32_0 : i32, i32
  }
  func.func @transform_3(%arg0: i32) -> (i32, i32) {
    %c0_i32 = arith.constant 0 : i32
    %c0_i32_0 = arith.constant 0 : i32
    %c0_i32_1 = arith.constant 0 : i32
    return %c0_i32, %c0_i32_0 : i32, i32
  }
  func.func @transform_4(%arg0: i32) -> (i32, i32, i32) {
    %c0_i32 = arith.constant 0 : i32
    %c0_i32_0 = arith.constant 0 : i32
    %c0_i32_1 = arith.constant 0 : i32
    %c0_i32_2 = arith.constant 0 : i32
    return %c0_i32, %c0_i32_0, %c0_i32_1 : i32, i32, i32
  }
  func.func @transform_5(%arg0: i32) -> (i32, i32, i32) {
    %c0_i32 = arith.constant 0 : i32
    %c0_i32_0 = arith.constant 0 : i32
    %c0_i32_1 = arith.constant 0 : i32
    %c0_i32_2 = arith.constant 0 : i32
    return %c0_i32, %c0_i32_0, %c0_i32_1 : i32, i32, i32
  }
  func.func @transform_6(%arg0: i32) -> (i32, i32) {
    %c0_i32 = arith.constant 0 : i32
    %c0_i32_0 = arith.constant 0 : i32
    %c0_i32_1 = arith.constant 0 : i32
    return %c0_i32, %c0_i32_0 : i32, i32
  }
  func.func @transform_7(%arg0: i32) -> (i32, i32) {
    %c0_i32 = arith.constant 0 : i32
    %c0_i32_0 = arith.constant 0 : i32
    %c0_i32_1 = arith.constant 0 : i32
    return %c0_i32, %c0_i32_0 : i32, i32
  }
  func.func @transform_8(%arg0: i32) -> (i32, i32) {
    %c0_i32 = arith.constant 0 : i32
    %c0_i32_0 = arith.constant 0 : i32
    %c0_i32_1 = arith.constant 0 : i32
    return %c0_i32, %c0_i32_0 : i32, i32
  }
}

</mosaic_0001>

<llo_original>
// kernel: rnn_classifier_forward.1
$region0: #{rnn_classifier_forward.1}
  #allocation0 [shape = 'u32[]', space=smem, size = 0x4, offset = 0x4, fixed_abs, tag = 'smem constant byte address 0x4 - core index']
  #allocation1 [shape = 'u32[72,128]{1,0:T(1,128)}', space=vmem, size = 0x9000, scoped, tag = 'internal scratch']
  #allocation2 [shape = 'f32[2,16,128]{2,1,0:T(8,128)}', space=vmem, size = 0x4000, scoped, tag = 'scratch operand']
  #allocation3 [shape = 'f32[128,128]{1,0:T(8,128)}', space=vmem, size = 0x10000, scoped, tag = 'scratch operand']
  %s0 = inlined_call_operand.vmem [shape: bf16[128,128], index: 0, kind: input, shape index: {}]
  %s1 = inlined_call_operand.vmem [shape: bf16[128,128], index: 1, kind: input, shape index: {}]
  %s2 = inlined_call_operand.vmem [shape: f32[1,128], index: 2, kind: input, shape index: {}]
  %s3 = inlined_call_operand.hbm [shape: bf16[128,128], index: 3, kind: input, shape index: {}]
  %s4 = inlined_call_operand.vmem [shape: bf16[1,256,128], index: 4, kind: input, shape index: {}]
  %s5 = inlined_call_operand.vmem [shape: f32[1,1,128], index: 5, kind: input, shape index: {}]
  %s6 = inlined_call_operand.hbm [shape: bf16[128,128], index: 6, kind: input, shape index: {}]
  %s7 = inlined_call_operand.vmem [shape: f32[1,128], index: 7, kind: input, shape index: {}]
  %s8 = inlined_call_operand.vmem [shape: f32[16,128], index: 8, kind: output, shape index: {}]
  %s9 = sld [smem:[#allocation0]]
  $region58: #{rnn_classifier_forward.1} parent=0
    _
  %s11 = ssub.s32 1, %s9
  %s12 = scalar_select 0, %s11, %s9
  $region1: #{rnn_classifier_forward.1} parent=0
    #allocation4 [shape = 'u8[32768]{0}', space=vmem, size = 0x8000, scoped, tag = 'input window, operand 3, single buffered']
    #allocation5 [shape = 's32[1]{0}', space=sflag, size = 0x4, scoped, tag = 'scoped memory for rnn_classifier_forward.1']
    #allocation6 [shape = 'u8[32768]{0}', space=vmem, size = 0x8000, scoped, tag = 'input window, operand 6, single buffered']
    #allocation7 [shape = 's32[1]{0}', space=sflag, size = 0x4, scoped, tag = 'scoped memory for rnn_classifier_forward.1']
    %13 = vsyncpa [#allocation5], 0
    %14 = vsyncpa [#allocation7], 0
    // Predicated region
    $region2: #{rnn_classifier_forward.1} parent=1 // pred_check
      _
    $region3: #{rnn_classifier_forward.1} parent=1 // pred_check_branch
      %16 = sbr.rel (0) target = $region5
    $region4: #{rnn_classifier_forward.1} parent=1 // pred_region
      _
    $region5: #{rnn_classifier_forward.1} parent=1 // pred_fallthru
      _
    // Predicated region
    $region6: #{rnn_classifier_forward.1} parent=1 // pred_check
      _
    $region7: #{rnn_classifier_forward.1} parent=1 // pred_check_branch
      %18 = sbr.rel (0) target = $region9
    $region8: #{rnn_classifier_forward.1} parent=1 // pred_region
      _
    $region9: #{rnn_classifier_forward.1} parent=1 // pred_fallthru
      _
    // Predicated region
    $region10: #{rnn_classifier_forward.1} parent=1 // pred_check
      _
    $region11: #{rnn_classifier_forward.1} parent=1 // pred_check_branch
      %20 = sbr.rel (0) target = $region13
    $region12: #{rnn_classifier_forward.1} parent=1 // pred_region
      _
    $region13: #{rnn_classifier_forward.1} parent=1 // pred_fallthru
      _
    // Predicated region
    $region14: #{rnn_classifier_forward.1} parent=1 // pred_check
      _
    $region15: #{rnn_classifier_forward.1} parent=1 // pred_check_branch
      %22 = sbr.rel (0) target = $region17
    $region16: #{rnn_classifier_forward.1} parent=1 // pred_region
      %24 = vsyncadd [#allocation5], 0
      %s25 = sshll.u32 %s3, 4
      %s26 = int_to_ptr.hbm [resolvable:$true] %s25
      %s27 = sshll.u32 [#allocation4], 4
      %s28 = int_to_ptr.vmem [resolvable:$true] %s27
      %33 = dma.hbm_to_vmem [thread:$0]  %s26, 1024, %s28, [#allocation5], 64, 64, 4
    $region17: #{rnn_classifier_forward.1} parent=1 // pred_fallthru
      _
    // Predicated region
    $region18: #{rnn_classifier_forward.1} parent=1 // pred_check
      _
    $region19: #{rnn_classifier_forward.1} parent=1 // pred_check_branch
      %35 = sbr.rel (0) target = $region21
    $region20: #{rnn_classifier_forward.1} parent=1 // pred_region
      _
    $region21: #{rnn_classifier_forward.1} parent=1 // pred_fallthru
      _
    // Predicated region
    $region22: #{rnn_classifier_forward.1} parent=1 // pred_check
      _
    $region23: #{rnn_classifier_forward.1} parent=1 // pred_check_branch
      %37 = sbr.rel (0) target = $region25
    $region24: #{rnn_classifier_forward.1} parent=1 // pred_region
      _
    $region25: #{rnn_classifier_forward.1} parent=1 // pred_fallthru
      _
    // Predicated region
    $region26: #{rnn_classifier_forward.1} parent=1 // pred_check
      _
    $region27: #{rnn_classifier_forward.1} parent=1 // pred_check_branch
      %39 = sbr.rel (0) target = $region29
    $region28: #{rnn_classifier_forward.1} parent=1 // pred_region
      %41 = vsyncadd [#allocation7], 0
      %s42 = sshll.u32 %s6, 4
      %s43 = int_to_ptr.hbm [resolvable:$true] %s42
      %s44 = sshll.u32 [#allocation6], 4
      %s45 = int_to_ptr.vmem [resolvable:$true] %s44
      %50 = dma.hbm_to_vmem [thread:$0]  %s43, 1024, %s45, [#allocation7], 64, 64, 4
    $region29: #{rnn_classifier_forward.1} parent=1 // pred_fallthru
      _
    // Predicated region
    $region30: #{rnn_classifier_forward.1} parent=1 // pred_check
      _
    $region31: #{rnn_classifier_forward.1} parent=1 // pred_check_branch
      %52 = sbr.rel (0) target = $region33
    $region32: #{rnn_classifier_forward.1} parent=1 // pred_region
      _
    $region33: #{rnn_classifier_forward.1} parent=1 // pred_fallthru
      _
    // Predicated region
    $region34: #{rnn_classifier_forward.1} parent=1 // pred_check
      _
    $region35: #{rnn_classifier_forward.1} parent=1 // pred_check_branch
      %54 = sbr.rel (0) target = $region37
    $region36: #{rnn_classifier_forward.1} parent=1 // pred_region
      %56 = dma.done [#allocation5], 1024
    $region37: #{rnn_classifier_forward.1} parent=1 // pred_fallthru
      _
    // Predicated region
    $region38: #{rnn_classifier_forward.1} parent=1 // pred_check
      _
    $region39: #{rnn_classifier_forward.1} parent=1 // pred_check_branch
      %58 = sbr.rel (0) target = $region41
    $region40: #{rnn_classifier_forward.1} parent=1 // pred_region
      %60 = dma.done [#allocation7], 1024
    $region41: #{rnn_classifier_forward.1} parent=1 // pred_fallthru
      _
    %p61 = scmp.eq.s32.totalorder 0, 0
    // Predicated region
    $region42: #{rnn_classifier_forward.1} parent=1 // pred_check
      %p62 = pneg %p61
    $region43: #{rnn_classifier_forward.1} parent=1 // pred_check_branch
      %64 = sbr.rel (%p62) target = $region45
    $region44: #{rnn_classifier_forward.1} parent=1 // pred_region
      %65 = vst [vmem:[#allocation2] sm:$0xff] 0.0
      %66 = vst [vmem:[#allocation2 + $0x8] sm:$0xff] 0.0
      %67 = vst [vmem:[#allocation2 + $0x10] sm:$0xff] 0.0
      %68 = vst [vmem:[#allocation2 + $0x18] sm:$0xff] 0.0
    $region45: #{rnn_classifier_forward.1} parent=1 // pred_fallthru
      _
    %v69 = vld [vmem:[%s0] sm:$0xf]
    %v70 = vld [vmem:[%s0 + $0x4] sm:$0xf]
    %v71 = vld [vmem:[%s0 + $0x8] sm:$0xf]
    %v72 = vld [vmem:[%s0 + $0xc] sm:$0xf]
    %v73 = vld [vmem:[%s0 + $0x10] sm:$0xf]
    %v74 = vld [vmem:[%s0 + $0x14] sm:$0xf]
    %v75 = vld [vmem:[%s0 + $0x18] sm:$0xf]
    %v76 = vld [vmem:[%s0 + $0x1c] sm:$0xf]
    %v77 = vld [vmem:[%s0 + $0x20] sm:$0xf]
    %v78 = vld [vmem:[%s0 + $0x24] sm:$0xf]
    %v79 = vld [vmem:[%s0 + $0x28] sm:$0xf]
    %v80 = vld [vmem:[%s0 + $0x2c] sm:$0xf]
    %v81 = vld [vmem:[%s0 + $0x30] sm:$0xf]
    %v82 = vld [vmem:[%s0 + $0x34] sm:$0xf]
    %v83 = vld [vmem:[%s0 + $0x38] sm:$0xf]
    %v84 = vld [vmem:[%s0 + $0x3c] sm:$0xf]
    %v85 = vld [vmem:[%s1] sm:$0xf]
    %v86 = vld [vmem:[%s1 + $0x4] sm:$0xf]
    %v87 = vld [vmem:[%s1 + $0x8] sm:$0xf]
    %v88 = vld [vmem:[%s1 + $0xc] sm:$0xf]
    %v89 = vld [vmem:[%s1 + $0x10] sm:$0xf]
    %v90 = vld [vmem:[%s1 + $0x14] sm:$0xf]
    %v91 = vld [vmem:[%s1 + $0x18] sm:$0xf]
    %v92 = vld [vmem:[%s1 + $0x1c] sm:$0xf]
    %v93 = vld [vmem:[%s1 + $0x20] sm:$0xf]
    %v94 = vld [vmem:[%s1 + $0x24] sm:$0xf]
    %v95 = vld [vmem:[%s1 + $0x28] sm:$0xf]
    %v96 = vld [vmem:[%s1 + $0x2c] sm:$0xf]
    %v97 = vld [vmem:[%s1 + $0x30] sm:$0xf]
    %v98 = vld [vmem:[%s1 + $0x34] sm:$0xf]
    %v99 = vld [vmem:[%s1 + $0x38] sm:$0xf]
    %v100 = vld [vmem:[%s1 + $0x3c] sm:$0xf]
    %v101 = vld [vmem:[%s2] sm:$0x1]
    %v103 = vperm.slane %v101, 0
    %v121 = vunpack.c.l.b16 %v69
    %v122 = vunpack.c.l.b16 %v70
    %v123 = vunpack.c.l.b16 %v71
    %v124 = vunpack.c.l.b16 %v72
    %v125 = vunpack.c.l.b16 %v73
    %v126 = vunpack.c.l.b16 %v74
    %v127 = vunpack.c.l.b16 %v75
    %v128 = vunpack.c.l.b16 %v76
    %v129 = vunpack.c.l.b16 %v77
    %v130 = vunpack.c.l.b16 %v78
    %v131 = vunpack.c.l.b16 %v79
    %v132 = vunpack.c.l.b16 %v80
    %v133 = vunpack.c.l.b16 %v81
    %v134 = vunpack.c.l.b16 %v82
    %v135 = vunpack.c.l.b16 %v83
    %v136 = vunpack.c.l.b16 %v84
    %v137 = vpack.c.b16 %v122, %v121
    %v138 = vpack.c.b16 %v124, %v123
    %v139 = vpack.c.b16 %v126, %v125
    %v140 = vpack.c.b16 %v128, %v127
    %v141 = vpack.c.b16 %v130, %v129
    %v142 = vpack.c.b16 %v132, %v131
    %v143 = vpack.c.b16 %v134, %v133
    %v144 = vpack.c.b16 %v136, %v135
    %v169 = vunpack.c.l.b16 %v85
    %v170 = vunpack.c.l.b16 %v86
    %v171 = vunpack.c.l.b16 %v87
    %v172 = vunpack.c.l.b16 %v88
    %v173 = vunpack.c.l.b16 %v89
    %v174 = vunpack.c.l.b16 %v90
    %v175 = vunpack.c.l.b16 %v91
    %v176 = vunpack.c.l.b16 %v92
    %v177 = vunpack.c.l.b16 %v93
    %v178 = vunpack.c.l.b16 %v94
    %v179 = vunpack.c.l.b16 %v95
    %v180 = vunpack.c.l.b16 %v96
    %v181 = vunpack.c.l.b16 %v97
    %v182 = vunpack.c.l.b16 %v98
    %v183 = vunpack.c.l.b16 %v99
    %v184 = vunpack.c.l.b16 %v100
    %v185 = vpack.c.b16 %v170, %v169
    %v186 = vpack.c.b16 %v172, %v171
    %v187 = vpack.c.b16 %v174, %v173
    %v188 = vpack.c.b16 %v176, %v175
    %v189 = vpack.c.b16 %v178, %v177
    %v190 = vpack.c.b16 %v180, %v179
    %v191 = vpack.c.b16 %v182, %v181
    %v192 = vpack.c.b16 %v184, %v183
    %201 = vmatpush.bf16.msra.mxu0 %v192
    %202 = vmatpush.bf16.msra.mxu0 %v191
    %203 = vmatpush.bf16.msra.mxu0 %v190
    %204 = vmatpush.bf16.msra.mxu0 %v189
    %205 = vmatpush.bf16.msra.mxu0 %v188
    %206 = vmatpush.bf16.msra.mxu0 %v187
    %207 = vmatpush.bf16.msra.mxu0 %v186
    %208 = vmatpush.bf16.msra.mxu0 %v185
    %209 = vmatmul.bf16.gmra.mxu0 %v137
    %v210 = vpop.f32.mrf.mxu0
    %v211 = vadd.f32 %v103, %v210
    %v212 = vpop.f32.mrf.mxu0
    %v213 = vadd.f32 %v103, %v212
    %214 = vmatmul.bf16.gmra.mxu0 %v138
    %v215 = vpop.f32.mrf.mxu0
    %v216 = vadd.f32 %v103, %v215
    %v217 = vpop.f32.mrf.mxu0
    %v218 = vadd.f32 %v103, %v217
    %219 = vmatmul.bf16.gmra.mxu0 %v139
    %v220 = vpop.f32.mrf.mxu0
    %v221 = vadd.f32 %v103, %v220
    %v222 = vpop.f32.mrf.mxu0
    %v223 = vadd.f32 %v103, %v222
    %224 = vmatmul.bf16.gmra.mxu0 %v140
    %v225 = vpop.f32.mrf.mxu0
    %v226 = vadd.f32 %v103, %v225
    %v227 = vpop.f32.mrf.mxu0
    %v228 = vadd.f32 %v103, %v227
    %229 = vmatmul.bf16.gmra.mxu0 %v141
    %v230 = vpop.f32.mrf.mxu0
    %v231 = vadd.f32 %v103, %v230
    %v232 = vpop.f32.mrf.mxu0
    %v233 = vadd.f32 %v103, %v232
    %234 = vmatmul.bf16.gmra.mxu0 %v142
    %v235 = vpop.f32.mrf.mxu0
    %v236 = vadd.f32 %v103, %v235
    %v237 = vpop.f32.mrf.mxu0
    %v238 = vadd.f32 %v103, %v237
    %239 = vmatmul.bf16.gmra.mxu0 %v143
    %v240 = vpop.f32.mrf.mxu0
    %v241 = vadd.f32 %v103, %v240
    %v242 = vpop.f32.mrf.mxu0
    %v243 = vadd.f32 %v103, %v242
    %244 = vmatmul.bf16.gmra.mxu0 %v144
    %v245 = vpop.f32.mrf.mxu0
    %v246 = vadd.f32 %v103, %v245
    %v247 = vpop.f32.mrf.mxu0
    %v248 = vadd.f32 %v103, %v247
    %249 = vdwg.mxu0
    %250 = vst [vmem:[#allocation3] sm:$0xff] %v211
    %251 = vst [vmem:[#allocation3 + $0x8] sm:$0xff] %v213
    %252 = vst [vmem:[#allocation3 + $0x10] sm:$0xff] %v216
    %253 = vst [vmem:[#allocation3 + $0x18] sm:$0xff] %v218
    %254 = vst [vmem:[#allocation3 + $0x20] sm:$0xff] %v221
    %255 = vst [vmem:[#allocation3 + $0x28] sm:$0xff] %v223
    %256 = vst [vmem:[#allocation3 + $0x30] sm:$0xff] %v226
    %257 = vst [vmem:[#allocation3 + $0x38] sm:$0xff] %v228
    %258 = vst [vmem:[#allocation3 + $0x40] sm:$0xff] %v231
    %259 = vst [vmem:[#allocation3 + $0x48] sm:$0xff] %v233
    %260 = vst [vmem:[#allocation3 + $0x50] sm:$0xff] %v236
    %261 = vst [vmem:[#allocation3 + $0x58] sm:$0xff] %v238
    %262 = vst [vmem:[#allocation3 + $0x60] sm:$0xff] %v241
    %263 = vst [vmem:[#allocation3 + $0x68] sm:$0xff] %v243
    %264 = vst [vmem:[#allocation3 + $0x70] sm:$0xff] %v246
    %265 = vst [vmem:[#allocation3 + $0x78] sm:$0xff] %v248
    %v266 = vld [vmem:[%s5] sm:$0x1]
    %v268 = vperm.slane %v266, 0
    %v270 = vld [vmem:[#allocation2] sm:$0xff]
    %v271 = vld [vmem:[#allocation2 + $0x8] sm:$0xff]
    %s272 = scalar_lea.vmem [#allocation2], 16
    %v273 = vld [vmem:[%s272] sm:$0xff]
    %v274 = vld [vmem:[%s272 + $0x8] sm:$0xff]
    %v275 = vld [vmem:[#allocation3] sm:$0xff]
    %v276 = vld [vmem:[#allocation3 + $0x8] sm:$0xff]
    %v277 = vpack.c.bf16 %v271, %v270
    %v278 = vld [vmem:[#allocation4] sm:$0xf]
    %v279 = vld [vmem:[#allocation4 + $0x4] sm:$0xf]
    %v280 = vld [vmem:[#allocation4 + $0x8] sm:$0xf]
    %v281 = vld [vmem:[#allocation4 + $0xc] sm:$0xf]
    %v282 = vld [vmem:[#allocation4 + $0x10] sm:$0xf]
    %v283 = vld [vmem:[#allocation4 + $0x14] sm:$0xf]
    %v284 = vld [vmem:[#allocation4 + $0x18] sm:$0xf]
    %v285 = vld [vmem:[#allocation4 + $0x1c] sm:$0xf]
    %v286 = vld [vmem:[#allocation4 + $0x20] sm:$0xf]
    %v287 = vld [vmem:[#allocation4 + $0x24] sm:$0xf]
    %v288 = vld [vmem:[#allocation4 + $0x28] sm:$0xf]
    %v289 = vld [vmem:[#allocation4 + $0x2c] sm:$0xf]
    %v290 = vld [vmem:[#allocation4 + $0x30] sm:$0xf]
    %v291 = vld [vmem:[#allocation4 + $0x34] sm:$0xf]
    %v292 = vld [vmem:[#allocation4 + $0x38] sm:$0xf]
    %v293 = vld [vmem:[#allocation4 + $0x3c] sm:$0xf]
    %v310 = vunpack.c.l.b16 %v278
    %v311 = vunpack.c.l.b16 %v279
    %v312 = vunpack.c.l.b16 %v280
    %v313 = vunpack.c.l.b16 %v281
    %v314 = vunpack.c.l.b16 %v282
    %v315 = vunpack.c.l.b16 %v283
    %v316 = vunpack.c.l.b16 %v284
    %v317 = vunpack.c.l.b16 %v285
    %v318 = vunpack.c.l.b16 %v286
    %v319 = vunpack.c.l.b16 %v287
    %v320 = vunpack.c.l.b16 %v288
    %v321 = vunpack.c.l.b16 %v289
    %v322 = vunpack.c.l.b16 %v290
    %v323 = vunpack.c.l.b16 %v291
    %v324 = vunpack.c.l.b16 %v292
    %v325 = vunpack.c.l.b16 %v293
    %v326 = vpack.c.b16 %v311, %v310
    %v327 = vpack.c.b16 %v313, %v312
    %v328 = vpack.c.b16 %v315, %v314
    %v329 = vpack.c.b16 %v317, %v316
    %v330 = vpack.c.b16 %v319, %v318
    %v331 = vpack.c.b16 %v321, %v320
    %v332 = vpack.c.b16 %v323, %v322
    %v333 = vpack.c.b16 %v325, %v324
    %342 = vmatpush.bf16.msra.mxu0 %v333
    %343 = vmatpush.bf16.msra.mxu0 %v332
    %344 = vmatpush.bf16.msra.mxu0 %v331
    %345 = vmatpush.bf16.msra.mxu0 %v330
    %346 = vmatpush.bf16.msra.mxu0 %v329
    %347 = vmatpush.bf16.msra.mxu0 %v328
    %348 = vmatpush.bf16.msra.mxu0 %v327
    %349 = vmatpush.bf16.msra.mxu0 %v326
    %350 = vmatmul.bf16.gmra.mxu0 %v277
    %v351 = vpop.f32.mrf.mxu0
    %v352 = vadd.f32 0.0, %v351
    %v353 = vpop.f32.mrf.mxu0
    %v354 = vadd.f32 0.0, %v353
    %355 = vdwg.mxu0
    %v356 = vadd.f32 %v275, %v352
    %v357 = vadd.f32 %v276, %v354
    %v358 = vtanh.pop %v356
    %v359 = vtanh.pop %v357
    %v360 = vpack.c.bf16 %v358, %v358
    %v361 = vpack.c.bf16 %v359, %v359
    %v362 = vpack.c.bf16 %v273, %v273
    %v363 = vpack.c.bf16 %v274, %v274
    %v366 = vunpack.c.l.b16 %v360
    %v367 = vunpack.c.l.b16 %v361
    %v368 = vpack.c.b16 %v367, %v366
    %v372 = vunpack.c.l.b16 %v362
    %v373 = vunpack.c.l.b16 %v363
    %v374 = vpack.c.b16 %v373, %v372
    %v376 = vld [vmem:[%s4] sm:$0xf]
    %v377 = vld [vmem:[%s4 + $0x4] sm:$0xf]
    %v378 = vld [vmem:[%s4 + $0x8] sm:$0xf]
    %v379 = vld [vmem:[%s4 + $0xc] sm:$0xf]
    %v380 = vld [vmem:[%s4 + $0x10] sm:$0xf]
    %v381 = vld [vmem:[%s4 + $0x14] sm:$0xf]
    %v382 = vld [vmem:[%s4 + $0x18] sm:$0xf]
    %v383 = vld [vmem:[%s4 + $0x1c] sm:$0xf]
    %v384 = vld [vmem:[%s4 + $0x20] sm:$0xf]
    %v385 = vld [vmem:[%s4 + $0x24] sm:$0xf]
    %v386 = vld [vmem:[%s4 + $0x28] sm:$0xf]
    %v387 = vld [vmem:[%s4 + $0x2c] sm:$0xf]
    %v388 = vld [vmem:[%s4 + $0x30] sm:$0xf]
    %v389 = vld [vmem:[%s4 + $0x34] sm:$0xf]
    %v390 = vld [vmem:[%s4 + $0x38] sm:$0xf]
    %v391 = vld [vmem:[%s4 + $0x3c] sm:$0xf]
    %v392 = vld [vmem:[%s4 + $0x40] sm:$0xf]
    %v393 = vld [vmem:[%s4 + $0x44] sm:$0xf]
    %v394 = vld [vmem:[%s4 + $0x48] sm:$0xf]
    %v395 = vld [vmem:[%s4 + $0x4c] sm:$0xf]
    %v396 = vld [vmem:[%s4 + $0x50] sm:$0xf]
    %v397 = vld [vmem:[%s4 + $0x54] sm:$0xf]
    %v398 = vld [vmem:[%s4 + $0x58] sm:$0xf]
    %v399 = vld [vmem:[%s4 + $0x5c] sm:$0xf]
    %v400 = vld [vmem:[%s4 + $0x60] sm:$0xf]
    %v401 = vld [vmem:[%s4 + $0x64] sm:$0xf]
    %v402 = vld [vmem:[%s4 + $0x68] sm:$0xf]
    %v403 = vld [vmem:[%s4 + $0x6c] sm:$0xf]
    %v404 = vld [vmem:[%s4 + $0x70] sm:$0xf]
    %v405 = vld [vmem:[%s4 + $0x74] sm:$0xf]
    %v406 = vld [vmem:[%s4 + $0x78] sm:$0xf]
    %v407 = vld [vmem:[%s4 + $0x7c] sm:$0xf]
    %v440 = vunpack.c.l.b16 %v376
    %v441 = vunpack.c.l.b16 %v377
    %v442 = vunpack.c.l.b16 %v378
    %v443 = vunpack.c.l.b16 %v379
    %v444 = vunpack.c.l.b16 %v380
    %v445 = vunpack.c.l.b16 %v381
    %v446 = vunpack.c.l.b16 %v382
    %v447 = vunpack.c.l.b16 %v383
    %v448 = vunpack.c.l.b16 %v384
    %v449 = vunpack.c.l.b16 %v385
    %v450 = vunpack.c.l.b16 %v386
    %v451 = vunpack.c.l.b16 %v387
    %v452 = vunpack.c.l.b16 %v388
    %v453 = vunpack.c.l.b16 %v389
    %v454 = vunpack.c.l.b16 %v390
    %v455 = vunpack.c.l.b16 %v391
    %v456 = vunpack.c.l.b16 %v392
    %v457 = vunpack.c.l.b16 %v393
    %v458 = vunpack.c.l.b16 %v394
    %v459 = vunpack.c.l.b16 %v395
    %v460 = vunpack.c.l.b16 %v396
    %v461 = vunpack.c.l.b16 %v397
    %v462 = vunpack.c.l.b16 %v398
    %v463 = vunpack.c.l.b16 %v399
    %v464 = vunpack.c.l.b16 %v400
    %v465 = vunpack.c.l.b16 %v401
    %v466 = vunpack.c.l.b16 %v402
    %v467 = vunpack.c.l.b16 %v403
    %v468 = vunpack.c.l.b16 %v404
    %v469 = vunpack.c.l.b16 %v405
    %v470 = vunpack.c.l.b16 %v406
    %v471 = vunpack.c.l.b16 %v407
    %v472 = vpack.c.b16 %v441, %v440
    %v473 = vpack.c.b16 %v443, %v442
    %v474 = vpack.c.b16 %v445, %v444
    %v475 = vpack.c.b16 %v447, %v446
    %v476 = vpack.c.b16 %v449, %v448
    %v477 = vpack.c.b16 %v451, %v450
    %v478 = vpack.c.b16 %v453, %v452
    %v479 = vpack.c.b16 %v455, %v454
    %v480 = vpack.c.b16 %v457, %v456
    %v481 = vpack.c.b16 %v459, %v458
    %v482 = vpack.c.b16 %v461, %v460
    %v483 = vpack.c.b16 %v463, %v462
    %v484 = vpack.c.b16 %v465, %v464
    %v485 = vpack.c.b16 %v467, %v466
    %v486 = vpack.c.b16 %v469, %v468
    %v487 = vpack.c.b16 %v471, %v470
    %504 = vmatpush.bf16.msra.mxu0 %v479
    %505 = vmatpush.bf16.msra.mxu0 %v478
    %506 = vmatpush.bf16.msra.mxu0 %v477
    %507 = vmatpush.bf16.msra.mxu0 %v476
    %508 = vmatpush.bf16.msra.mxu0 %v475
    %509 = vmatpush.bf16.msra.mxu0 %v474
    %510 = vmatpush.bf16.msra.mxu0 %v473
    %511 = vmatpush.bf16.msra.mxu0 %v472
    %512 = vmatmul.bf16.gmra.mxu0 %v368
    %v513 = vpop.f32.mrf.mxu0
    %v514 = vadd.f32 %v268, %v513
    %v515 = vpop.f32.mrf.mxu0
    %v516 = vadd.f32 %v268, %v515
    %517 = vdwg.mxu0
    %518 = vmatpush.bf16.msra.mxu0 %v487
    %519 = vmatpush.bf16.msra.mxu0 %v486
    %520 = vmatpush.bf16.msra.mxu0 %v485
    %521 = vmatpush.bf16.msra.mxu0 %v484
    %522 = vmatpush.bf16.msra.mxu0 %v483
    %523 = vmatpush.bf16.msra.mxu0 %v482
    %524 = vmatpush.bf16.msra.mxu0 %v481
    %525 = vmatpush.bf16.msra.mxu0 %v480
    %526 = vmatmul.bf16.gmra.mxu0 %v374
    %v527 = vpop.f32.mrf.mxu0
    %v528 = vadd.f32 %v514, %v527
    %v529 = vpop.f32.mrf.mxu0
    %v530 = vadd.f32 %v516, %v529
    %531 = vdwg.mxu0
    %v532 = vtanh.pop %v528
    %v533 = vtanh.pop %v530
    %s534 = scalar_lea.vmem [#allocation3], 16
    %v535 = vld [vmem:[%s534] sm:$0xff]
    %v536 = vld [vmem:[%s534 + $0x8] sm:$0xff]
    %537 = vmatpush.bf16.msra.mxu0 %v333
    %538 = vmatpush.bf16.msra.mxu0 %v332
    %539 = vmatpush.bf16.msra.mxu0 %v331
    %540 = vmatpush.bf16.msra.mxu0 %v330
    %541 = vmatpush.bf16.msra.mxu0 %v329
    %542 = vmatpush.bf16.msra.mxu0 %v328
    %543 = vmatpush.bf16.msra.mxu0 %v327
    %544 = vmatpush.bf16.msra.mxu0 %v326
    %545 = vmatmul.bf16.gmra.mxu0 %v368
    %v546 = vpop.f32.mrf.mxu0
    %v547 = vadd.f32 0.0, %v546
    %v548 = vpop.f32.mrf.mxu0
    %v549 = vadd.f32 0.0, %v548
    %550 = vdwg.mxu0
    %v551 = vadd.f32 %v535, %v547
    %v552 = vadd.f32 %v536, %v549
    %v553 = vtanh.pop %v551
    %v554 = vtanh.pop %v552
    %v555 = vpack.c.bf16 %v553, %v553
    %v556 = vpack.c.bf16 %v554, %v554
    %v557 = vpack.c.bf16 %v532, %v532
    %v558 = vpack.c.bf16 %v533, %v533
    %v561 = vunpack.c.l.b16 %v555
    %v562 = vunpack.c.l.b16 %v556
    %v563 = vpack.c.b16 %v562, %v561
    %v567 = vunpack.c.l.b16 %v557
    %v568 = vunpack.c.l.b16 %v558
    %v569 = vpack.c.b16 %v568, %v567
    %571 = vmatpush.bf16.msra.mxu0 %v479
    %572 = vmatpush.bf16.msra.mxu0 %v478
    %573 = vmatpush.bf16.msra.mxu0 %v477
    %574 = vmatpush.bf16.msra.mxu0 %v476
    %575 = vmatpush.bf16.msra.mxu0 %v475
    %576 = vmatpush.bf16.msra.mxu0 %v474
    %577 = vmatpush.bf16.msra.mxu0 %v473
    %578 = vmatpush.bf16.msra.mxu0 %v472
    %579 = vmatmul.bf16.gmra.mxu0 %v563
    %v580 = vpop.f32.mrf.mxu0
    %v581 = vadd.f32 %v268, %v580
    %v582 = vpop.f32.mrf.mxu0
    %v583 = vadd.f32 %v268, %v582
    %584 = vdwg.mxu0
    %585 = vmatpush.bf16.msra.mxu0 %v487
    %586 = vmatpush.bf16.msra.mxu0 %v486
    %587 = vmatpush.bf16.msra.mxu0 %v485
    %588 = vmatpush.bf16.msra.mxu0 %v484
    %589 = vmatpush.bf16.msra.mxu0 %v483
    %590 = vmatpush.bf16.msra.mxu0 %v482
    %591 = vmatpush.bf16.msra.mxu0 %v481
    %592 = vmatpush.bf16.msra.mxu0 %v480
    %593 = vmatmul.bf16.gmra.mxu0 %v569
    %v594 = vpop.f32.mrf.mxu0
    %v595 = vadd.f32 %v581, %v594
    %v596 = vpop.f32.mrf.mxu0
    %v597 = vadd.f32 %v583, %v596
    %598 = vdwg.mxu0
    %v599 = vtanh.pop %v595
    %v600 = vtanh.pop %v597
    %s601 = scalar_lea.vmem [#allocation3], 32
    %v602 = vld [vmem:[%s601] sm:$0xff]
    %v603 = vld [vmem:[%s601 + $0x8] sm:$0xff]
    %604 = vmatpush.bf16.msra.mxu0 %v333
    %605 = vmatpush.bf16.msra.mxu0 %v332
    %606 = vmatpush.bf16.msra.mxu0 %v331
    %607 = vmatpush.bf16.msra.mxu0 %v330
    %608 = vmatpush.bf16.msra.mxu0 %v329
    %609 = vmatpush.bf16.msra.mxu0 %v328
    %610 = vmatpush.bf16.msra.mxu0 %v327
    %611 = vmatpush.bf16.msra.mxu0 %v326
    %612 = vmatmul.bf16.gmra.mxu0 %v563
    %v613 = vpop.f32.mrf.mxu0
    %v614 = vadd.f32 0.0, %v613
    %v615 = vpop.f32.mrf.mxu0
    %v616 = vadd.f32 0.0, %v615
    %617 = vdwg.mxu0
    %v618 = vadd.f32 %v602, %v614
    %v619 = vadd.f32 %v603, %v616
    %v620 = vtanh.pop %v618
    %v621 = vtanh.pop %v619
    %v622 = vpack.c.bf16 %v620, %v620
    %v623 = vpack.c.bf16 %v621, %v621
    %v624 = vpack.c.bf16 %v599, %v599
    %v625 = vpack.c.bf16 %v600, %v600
    %v628 = vunpack.c.l.b16 %v622
    %v629 = vunpack.c.l.b16 %v623
    %v630 = vpack.c.b16 %v629, %v628
    %v634 = vunpack.c.l.b16 %v624
    %v635 = vunpack.c.l.b16 %v625
    %v636 = vpack.c.b16 %v635, %v634
    %638 = vmatpush.bf16.msra.mxu0 %v479
    %639 = vmatpush.bf16.msra.mxu0 %v478
    %640 = vmatpush.bf16.msra.mxu0 %v477
    %641 = vmatpush.bf16.msra.mxu0 %v476
    %642 = vmatpush.bf16.msra.mxu0 %v475
    %643 = vmatpush.bf16.msra.mxu0 %v474
    %644 = vmatpush.bf16.msra.mxu0 %v473
    %645 = vmatpush.bf16.msra.mxu0 %v472
    %646 = vmatmul.bf16.gmra.mxu0 %v630
    %v647 = vpop.f32.mrf.mxu0
    %v648 = vadd.f32 %v268, %v647
    %v649 = vpop.f32.mrf.mxu0
    %v650 = vadd.f32 %v268, %v649
    %651 = vdwg.mxu0
    %652 = vmatpush.bf16.msra.mxu0 %v487
    %653 = vmatpush.bf16.msra.mxu0 %v486
    %654 = vmatpush.bf16.msra.mxu0 %v485
    %655 = vmatpush.bf16.msra.mxu0 %v484
    %656 = vmatpush.bf16.msra.mxu0 %v483
    %657 = vmatpush.bf16.msra.mxu0 %v482
    %658 = vmatpush.bf16.msra.mxu0 %v481
    %659 = vmatpush.bf16.msra.mxu0 %v480
    %660 = vmatmul.bf16.gmra.mxu0 %v636
    %v661 = vpop.f32.mrf.mxu0
    %v662 = vadd.f32 %v648, %v661
    %v663 = vpop.f32.mrf.mxu0
    %v664 = vadd.f32 %v650, %v663
    %665 = vdwg.mxu0
    %v666 = vtanh.pop %v662
    %v667 = vtanh.pop %v664
    %s668 = scalar_lea.vmem [#allocation3], 48
    %v669 = vld [vmem:[%s668] sm:$0xff]
    %v670 = vld [vmem:[%s668 + $0x8] sm:$0xff]
    %671 = vmatpush.bf16.msra.mxu0 %v333
    %672 = vmatpush.bf16.msra.mxu0 %v332
    %673 = vmatpush.bf16.msra.mxu0 %v331
    %674 = vmatpush.bf16.msra.mxu0 %v330
    %675 = vmatpush.bf16.msra.mxu0 %v329
    %676 = vmatpush.bf16.msra.mxu0 %v328
    %677 = vmatpush.bf16.msra.mxu0 %v327
    %678 = vmatpush.bf16.msra.mxu0 %v326
    %679 = vmatmul.bf16.gmra.mxu0 %v630
    %v680 = vpop.f32.mrf.mxu0
    %v681 = vadd.f32 0.0, %v680
    %v682 = vpop.f32.mrf.mxu0
    %v683 = vadd.f32 0.0, %v682
    %684 = vdwg.mxu0
    %v685 = vadd.f32 %v669, %v681
    %v686 = vadd.f32 %v670, %v683
    %v687 = vtanh.pop %v685
    %v688 = vtanh.pop %v686
    %v689 = vpack.c.bf16 %v687, %v687
    %v690 = vpack.c.bf16 %v688, %v688
    %v691 = vpack.c.bf16 %v666, %v666
    %v692 = vpack.c.bf16 %v667, %v667
    %v695 = vunpack.c.l.b16 %v689
    %v696 = vunpack.c.l.b16 %v690
    %v697 = vpack.c.b16 %v696, %v695
    %v701 = vunpack.c.l.b16 %v691
    %v702 = vunpack.c.l.b16 %v692
    %v703 = vpack.c.b16 %v702, %v701
    %705 = vmatpush.bf16.msra.mxu0 %v479
    %706 = vmatpush.bf16.msra.mxu0 %v478
    %707 = vmatpush.bf16.msra.mxu0 %v477
    %708 = vmatpush.bf16.msra.mxu0 %v476
    %709 = vmatpush.bf16.msra.mxu0 %v475
    %710 = vmatpush.bf16.msra.mxu0 %v474
    %711 = vmatpush.bf16.msra.mxu0 %v473
    %712 = vmatpush.bf16.msra.mxu0 %v472
    %713 = vmatmul.bf16.gmra.mxu0 %v697
    %v714 = vpop.f32.mrf.mxu0
    %v715 = vadd.f32 %v268, %v714
    %v716 = vpop.f32.mrf.mxu0
    %v717 = vadd.f32 %v268, %v716
    %718 = vdwg.mxu0
    %719 = vmatpush.bf16.msra.mxu0 %v487
    %720 = vmatpush.bf16.msra.mxu0 %v486
    %721 = vmatpush.bf16.msra.mxu0 %v485
    %722 = vmatpush.bf16.msra.mxu0 %v484
    %723 = vmatpush.bf16.msra.mxu0 %v483
    %724 = vmatpush.bf16.msra.mxu0 %v482
    %725 = vmatpush.bf16.msra.mxu0 %v481
    %726 = vmatpush.bf16.msra.mxu0 %v480
    %727 = vmatmul.bf16.gmra.mxu0 %v703
    %v728 = vpop.f32.mrf.mxu0
    %v729 = vadd.f32 %v715, %v728
    %v730 = vpop.f32.mrf.mxu0
    %v731 = vadd.f32 %v717, %v730
    %732 = vdwg.mxu0
    %v733 = vtanh.pop %v729
    %v734 = vtanh.pop %v731
    %s735 = scalar_lea.vmem [#allocation3], 64
    %v736 = vld [vmem:[%s735] sm:$0xff]
    %v737 = vld [vmem:[%s735 + $0x8] sm:$0xff]
    %738 = vmatpush.bf16.msra.mxu0 %v333
    %739 = vmatpush.bf16.msra.mxu0 %v332
    %740 = vmatpush.bf16.msra.mxu0 %v331
    %741 = vmatpush.bf16.msra.mxu0 %v330
    %742 = vmatpush.bf16.msra.mxu0 %v329
    %743 = vmatpush.bf16.msra.mxu0 %v328
    %744 = vmatpush.bf16.msra.mxu0 %v327
    %745 = vmatpush.bf16.msra.mxu0 %v326
    %746 = vmatmul.bf16.gmra.mxu0 %v697
    %v747 = vpop.f32.mrf.mxu0
    %v748 = vadd.f32 0.0, %v747
    %v749 = vpop.f32.mrf.mxu0
    %v750 = vadd.f32 0.0, %v749
    %751 = vdwg.mxu0
    %v752 = vadd.f32 %v736, %v748
    %v753 = vadd.f32 %v737, %v750
    %v754 = vtanh.pop %v752
    %v755 = vtanh.pop %v753
    %v756 = vpack.c.bf16 %v754, %v754
    %v757 = vpack.c.bf16 %v755, %v755
    %v758 = vpack.c.bf16 %v733, %v733
    %v759 = vpack.c.bf16 %v734, %v734
    %v762 = vunpack.c.l.b16 %v756
    %v763 = vunpack.c.l.b16 %v757
    %v764 = vpack.c.b16 %v763, %v762
    %v768 = vunpack.c.l.b16 %v758
    %v769 = vunpack.c.l.b16 %v759
    %v770 = vpack.c.b16 %v769, %v768
    %772 = vmatpush.bf16.msra.mxu0 %v479
    %773 = vmatpush.bf16.msra.mxu0 %v478
    %774 = vmatpush.bf16.msra.mxu0 %v477
    %775 = vmatpush.bf16.msra.mxu0 %v476
    %776 = vmatpush.bf16.msra.mxu0 %v475
    %777 = vmatpush.bf16.msra.mxu0 %v474
    %778 = vmatpush.bf16.msra.mxu0 %v473
    %779 = vmatpush.bf16.msra.mxu0 %v472
    %780 = vmatmul.bf16.gmra.mxu0 %v764
    %v781 = vpop.f32.mrf.mxu0
    %v782 = vadd.f32 %v268, %v781
    %v783 = vpop.f32.mrf.mxu0
    %v784 = vadd.f32 %v268, %v783
    %785 = vdwg.mxu0
    %786 = vmatpush.bf16.msra.mxu0 %v487
    %787 = vmatpush.bf16.msra.mxu0 %v486
    %788 = vmatpush.bf16.msra.mxu0 %v485
    %789 = vmatpush.bf16.msra.mxu0 %v484
    %790 = vmatpush.bf16.msra.mxu0 %v483
    %791 = vmatpush.bf16.msra.mxu0 %v482
    %792 = vmatpush.bf16.msra.mxu0 %v481
    %793 = vmatpush.bf16.msra.mxu0 %v480
    %794 = vmatmul.bf16.gmra.mxu0 %v770
    %v795 = vpop.f32.mrf.mxu0
    %v796 = vadd.f32 %v782, %v795
    %v797 = vpop.f32.mrf.mxu0
    %v798 = vadd.f32 %v784, %v797
    %799 = vdwg.mxu0
    %v800 = vtanh.pop %v796
    %v801 = vtanh.pop %v798
    %s802 = scalar_lea.vmem [#allocation3], 80
    %v803 = vld [vmem:[%s802] sm:$0xff]
    %v804 = vld [vmem:[%s802 + $0x8] sm:$0xff]
    %805 = vmatpush.bf16.msra.mxu0 %v333
    %806 = vmatpush.bf16.msra.mxu0 %v332
    %807 = vmatpush.bf16.msra.mxu0 %v331
    %808 = vmatpush.bf16.msra.mxu0 %v330
    %809 = vmatpush.bf16.msra.mxu0 %v329
    %810 = vmatpush.bf16.msra.mxu0 %v328
    %811 = vmatpush.bf16.msra.mxu0 %v327
    %812 = vmatpush.bf16.msra.mxu0 %v326
    %813 = vmatmul.bf16.gmra.mxu0 %v764
    %v814 = vpop.f32.mrf.mxu0
    %v815 = vadd.f32 0.0, %v814
    %v816 = vpop.f32.mrf.mxu0
    %v817 = vadd.f32 0.0, %v816
    %818 = vdwg.mxu0
    %v819 = vadd.f32 %v803, %v815
    %v820 = vadd.f32 %v804, %v817
    %v821 = vtanh.pop %v819
    %v822 = vtanh.pop %v820
    %v823 = vpack.c.bf16 %v821, %v821
    %v824 = vpack.c.bf16 %v822, %v822
    %v825 = vpack.c.bf16 %v800, %v800
    %v826 = vpack.c.bf16 %v801, %v801
    %v829 = vunpack.c.l.b16 %v823
    %v830 = vunpack.c.l.b16 %v824
    %v831 = vpack.c.b16 %v830, %v829
    %v835 = vunpack.c.l.b16 %v825
    %v836 = vunpack.c.l.b16 %v826
    %v837 = vpack.c.b16 %v836, %v835
    %839 = vmatpush.bf16.msra.mxu0 %v479
    %840 = vmatpush.bf16.msra.mxu0 %v478
    %841 = vmatpush.bf16.msra.mxu0 %v477
    %842 = vmatpush.bf16.msra.mxu0 %v476
    %843 = vmatpush.bf16.msra.mxu0 %v475
    %844 = vmatpush.bf16.msra.mxu0 %v474
    %845 = vmatpush.bf16.msra.mxu0 %v473
    %846 = vmatpush.bf16.msra.mxu0 %v472
    %847 = vmatmul.bf16.gmra.mxu0 %v831
    %v848 = vpop.f32.mrf.mxu0
    %v849 = vadd.f32 %v268, %v848
    %v850 = vpop.f32.mrf.mxu0
    %v851 = vadd.f32 %v268, %v850
    %852 = vdwg.mxu0
    %853 = vmatpush.bf16.msra.mxu0 %v487
    %854 = vmatpush.bf16.msra.mxu0 %v486
    %855 = vmatpush.bf16.msra.mxu0 %v485
    %856 = vmatpush.bf16.msra.mxu0 %v484
    %857 = vmatpush.bf16.msra.mxu0 %v483
    %858 = vmatpush.bf16.msra.mxu0 %v482
    %859 = vmatpush.bf16.msra.mxu0 %v481
    %860 = vmatpush.bf16.msra.mxu0 %v480
    %861 = vmatmul.bf16.gmra.mxu0 %v837
    %v862 = vpop.f32.mrf.mxu0
    %v863 = vadd.f32 %v849, %v862
    %v864 = vpop.f32.mrf.mxu0
    %v865 = vadd.f32 %v851, %v864
    %866 = vdwg.mxu0
    %v867 = vtanh.pop %v863
    %v868 = vtanh.pop %v865
    %s869 = scalar_lea.vmem [#allocation3], 96
    %v870 = vld [vmem:[%s869] sm:$0xff]
    %v871 = vld [vmem:[%s869 + $0x8] sm:$0xff]
    %872 = vmatpush.bf16.msra.mxu0 %v333
    %873 = vmatpush.bf16.msra.mxu0 %v332
    %874 = vmatpush.bf16.msra.mxu0 %v331
    %875 = vmatpush.bf16.msra.mxu0 %v330
    %876 = vmatpush.bf16.msra.mxu0 %v329
    %877 = vmatpush.bf16.msra.mxu0 %v328
    %878 = vmatpush.bf16.msra.mxu0 %v327
    %879 = vmatpush.bf16.msra.mxu0 %v326
    %880 = vmatmul.bf16.gmra.mxu0 %v831
    %v881 = vpop.f32.mrf.mxu0
    %v882 = vadd.f32 0.0, %v881
    %v883 = vpop.f32.mrf.mxu0
    %v884 = vadd.f32 0.0, %v883
    %885 = vdwg.mxu0
    %v886 = vadd.f32 %v870, %v882
    %v887 = vadd.f32 %v871, %v884
    %v888 = vtanh.pop %v886
    %v889 = vtanh.pop %v887
    %v890 = vpack.c.bf16 %v888, %v888
    %v891 = vpack.c.bf16 %v889, %v889
    %v892 = vpack.c.bf16 %v867, %v867
    %v893 = vpack.c.bf16 %v868, %v868
    %v896 = vunpack.c.l.b16 %v890
    %v897 = vunpack.c.l.b16 %v891
    %v898 = vpack.c.b16 %v897, %v896
    %v902 = vunpack.c.l.b16 %v892
    %v903 = vunpack.c.l.b16 %v893
    %v904 = vpack.c.b16 %v903, %v902
    %906 = vmatpush.bf16.msra.mxu0 %v479
    %907 = vmatpush.bf16.msra.mxu0 %v478
    %908 = vmatpush.bf16.msra.mxu0 %v477
    %909 = vmatpush.bf16.msra.mxu0 %v476
    %910 = vmatpush.bf16.msra.mxu0 %v475
    %911 = vmatpush.bf16.msra.mxu0 %v474
    %912 = vmatpush.bf16.msra.mxu0 %v473
    %913 = vmatpush.bf16.msra.mxu0 %v472
    %914 = vmatmul.bf16.gmra.mxu0 %v898
    %v915 = vpop.f32.mrf.mxu0
    %v916 = vadd.f32 %v268, %v915
    %v917 = vpop.f32.mrf.mxu0
    %v918 = vadd.f32 %v268, %v917
    %919 = vdwg.mxu0
    %920 = vmatpush.bf16.msra.mxu0 %v487
    %921 = vmatpush.bf16.msra.mxu0 %v486
    %922 = vmatpush.bf16.msra.mxu0 %v485
    %923 = vmatpush.bf16.msra.mxu0 %v484
    %924 = vmatpush.bf16.msra.mxu0 %v483
    %925 = vmatpush.bf16.msra.mxu0 %v482
    %926 = vmatpush.bf16.msra.mxu0 %v481
    %927 = vmatpush.bf16.msra.mxu0 %v480
    %928 = vmatmul.bf16.gmra.mxu0 %v904
    %v929 = vpop.f32.mrf.mxu0
    %v930 = vadd.f32 %v916, %v929
    %v931 = vpop.f32.mrf.mxu0
    %v932 = vadd.f32 %v918, %v931
    %933 = vdwg.mxu0
    %v934 = vtanh.pop %v930
    %v935 = vtanh.pop %v932
    %s936 = scalar_lea.vmem [#allocation3], 112
    %v937 = vld [vmem:[%s936] sm:$0xff]
    %v938 = vld [vmem:[%s936 + $0x8] sm:$0xff]
    %939 = vmatpush.bf16.msra.mxu0 %v333
    %940 = vmatpush.bf16.msra.mxu0 %v332
    %941 = vmatpush.bf16.msra.mxu0 %v331
    %942 = vmatpush.bf16.msra.mxu0 %v330
    %943 = vmatpush.bf16.msra.mxu0 %v329
    %944 = vmatpush.bf16.msra.mxu0 %v328
    %945 = vmatpush.bf16.msra.mxu0 %v327
    %946 = vmatpush.bf16.msra.mxu0 %v326
    %947 = vmatmul.bf16.gmra.mxu0 %v898
    %v948 = vpop.f32.mrf.mxu0
    %v949 = vadd.f32 0.0, %v948
    %v950 = vpop.f32.mrf.mxu0
    %v951 = vadd.f32 0.0, %v950
    %952 = vdwg.mxu0
    %v953 = vadd.f32 %v937, %v949
    %v954 = vadd.f32 %v938, %v951
    %v955 = vtanh.pop %v953
    %v956 = vtanh.pop %v954
    %v957 = vpack.c.bf16 %v955, %v955
    %v958 = vpack.c.bf16 %v956, %v956
    %v959 = vpack.c.bf16 %v934, %v934
    %v960 = vpack.c.bf16 %v935, %v935
    %v963 = vunpack.c.l.b16 %v957
    %v964 = vunpack.c.l.b16 %v958
    %v965 = vpack.c.b16 %v964, %v963
    %v969 = vunpack.c.l.b16 %v959
    %v970 = vunpack.c.l.b16 %v960
    %v971 = vpack.c.b16 %v970, %v969
    %973 = vmatpush.bf16.msra.mxu0 %v479
    %974 = vmatpush.bf16.msra.mxu0 %v478
    %975 = vmatpush.bf16.msra.mxu0 %v477
    %976 = vmatpush.bf16.msra.mxu0 %v476
    %977 = vmatpush.bf16.msra.mxu0 %v475
    %978 = vmatpush.bf16.msra.mxu0 %v474
    %979 = vmatpush.bf16.msra.mxu0 %v473
    %980 = vmatpush.bf16.msra.mxu0 %v472
    %981 = vmatmul.bf16.gmra.mxu0 %v965
    %v982 = vpop.f32.mrf.mxu0
    %v983 = vadd.f32 %v268, %v982
    %v984 = vpop.f32.mrf.mxu0
    %v985 = vadd.f32 %v268, %v984
    %986 = vdwg.mxu0
    %987 = vmatpush.bf16.msra.mxu0 %v487
    %988 = vmatpush.bf16.msra.mxu0 %v486
    %989 = vmatpush.bf16.msra.mxu0 %v485
    %990 = vmatpush.bf16.msra.mxu0 %v484
    %991 = vmatpush.bf16.msra.mxu0 %v483
    %992 = vmatpush.bf16.msra.mxu0 %v482
    %993 = vmatpush.bf16.msra.mxu0 %v481
    %994 = vmatpush.bf16.msra.mxu0 %v480
    %995 = vmatmul.bf16.gmra.mxu0 %v971
    %v996 = vpop.f32.mrf.mxu0
    %v997 = vadd.f32 %v983, %v996
    %v998 = vpop.f32.mrf.mxu0
    %v999 = vadd.f32 %v985, %v998
    %1000 = vdwg.mxu0
    %v1001 = vtanh.pop %v997
    %v1002 = vtanh.pop %v999
    %1003 = vst [vmem:[#allocation2] sm:$0xff] %v955
    %1004 = vst [vmem:[#allocation2 + $0x8] sm:$0xff] %v956
    %1005 = vst [vmem:[%s272] sm:$0xff] %v1001
    %1006 = vst [vmem:[%s272 + $0x8] sm:$0xff] %v1002
    // Predicated region
    $region46: #{rnn_classifier_forward.1} parent=1 // pred_check
      %p1007 = pneg %p61
    $region47: #{rnn_classifier_forward.1} parent=1 // pred_check_branch
      %1009 = sbr.rel (%p1007) target = $region49
    $region48: #{rnn_classifier_forward.1} parent=1 // pred_region
      %v1010 = vpack.c.bf16 %v1002, %v1001
      %v1011 = vld [vmem:[#allocation6] sm:$0xf]
      %v1012 = vld [vmem:[#allocation6 + $0x4] sm:$0xf]
      %v1013 = vld [vmem:[#allocation6 + $0x8] sm:$0xf]
      %v1014 = vld [vmem:[#allocation6 + $0xc] sm:$0xf]
      %v1015 = vld [vmem:[#allocation6 + $0x10] sm:$0xf]
      %v1016 = vld [vmem:[#allocation6 + $0x14] sm:$0xf]
      %v1017 = vld [vmem:[#allocation6 + $0x18] sm:$0xf]
      %v1018 = vld [vmem:[#allocation6 + $0x1c] sm:$0xf]
      %v1019 = vld [vmem:[#allocation6 + $0x20] sm:$0xf]
      %v1020 = vld [vmem:[#allocation6 + $0x24] sm:$0xf]
      %v1021 = vld [vmem:[#allocation6 + $0x28] sm:$0xf]
      %v1022 = vld [vmem:[#allocation6 + $0x2c] sm:$0xf]
      %v1023 = vld [vmem:[#allocation6 + $0x30] sm:$0xf]
      %v1024 = vld [vmem:[#allocation6 + $0x34] sm:$0xf]
      %v1025 = vld [vmem:[#allocation6 + $0x38] sm:$0xf]
      %v1026 = vld [vmem:[#allocation6 + $0x3c] sm:$0xf]
      %v1027 = vld [vmem:[%s7] sm:$0x1]
      %v1029 = vperm.slane %v1027, 0
      %v1047 = vunpack.c.l.b16 %v1011
      %v1048 = vunpack.c.l.b16 %v1012
      %v1049 = vunpack.c.l.b16 %v1013
      %v1050 = vunpack.c.l.b16 %v1014
      %v1051 = vunpack.c.l.b16 %v1015
      %v1052 = vunpack.c.l.b16 %v1016
      %v1053 = vunpack.c.l.b16 %v1017
      %v1054 = vunpack.c.l.b16 %v1018
      %v1055 = vunpack.c.l.b16 %v1019
      %v1056 = vunpack.c.l.b16 %v1020
      %v1057 = vunpack.c.l.b16 %v1021
      %v1058 = vunpack.c.l.b16 %v1022
      %v1059 = vunpack.c.l.b16 %v1023
      %v1060 = vunpack.c.l.b16 %v1024
      %v1061 = vunpack.c.l.b16 %v1025
      %v1062 = vunpack.c.l.b16 %v1026
      %v1063 = vpack.c.b16 %v1048, %v1047
      %v1064 = vpack.c.b16 %v1050, %v1049
      %v1065 = vpack.c.b16 %v1052, %v1051
      %v1066 = vpack.c.b16 %v1054, %v1053
      %v1067 = vpack.c.b16 %v1056, %v1055
      %v1068 = vpack.c.b16 %v1058, %v1057
      %v1069 = vpack.c.b16 %v1060, %v1059
      %v1070 = vpack.c.b16 %v1062, %v1061
      %1079 = vmatpush.bf16.msra.mxu0 %v1070
      %1080 = vmatpush.bf16.msra.mxu0 %v1069
      %1081 = vmatpush.bf16.msra.mxu0 %v1068
      %1082 = vmatpush.bf16.msra.mxu0 %v1067
      %1083 = vmatpush.bf16.msra.mxu0 %v1066
      %1084 = vmatpush.bf16.msra.mxu0 %v1065
      %1085 = vmatpush.bf16.msra.mxu0 %v1064
      %1086 = vmatpush.bf16.msra.mxu0 %v1063
      %1087 = vmatmul.bf16.gmra.mxu0 %v1010
      %v1088 = vpop.f32.mrf.mxu0
      %v1089 = vadd.f32 %v1029, %v1088
      %v1090 = vpop.f32.mrf.mxu0
      %v1091 = vadd.f32 %v1029, %v1090
      %1092 = vdwg.mxu0
      %1093 = vst [vmem:[%s8] sm:$0xff] %v1089
      %1094 = vst [vmem:[%s8 + $0x8] sm:$0xff] %v1091
    $region49: #{rnn_classifier_forward.1} parent=1 // pred_fallthru
      _
    // Predicated region
    $region50: #{rnn_classifier_forward.1} parent=1 // pred_check
      _
    $region51: #{rnn_classifier_forward.1} parent=1 // pred_check_branch
      %1096 = sbr.rel (0) target = $region53
    $region52: #{rnn_classifier_forward.1} parent=1 // pred_region
      _
    $region53: #{rnn_classifier_forward.1} parent=1 // pred_fallthru
      _
    // Predicated region
    $region54: #{rnn_classifier_forward.1} parent=1 // pred_check
      _
    $region55: #{rnn_classifier_forward.1} parent=1 // pred_check_branch
      %1098 = sbr.rel (0) target = $region57
    $region56: #{rnn_classifier_forward.1} parent=1 // pred_region
      _
    $region57: #{rnn_classifier_forward.1} parent=1 // pred_fallthru
      _
    %1099 = vsyncpa [#allocation5], 1
    %1100 = vsyncpa [#allocation7], 1

</llo_original>
